<compile_context>
chip_gen: v7x
topology: tpu7x:2x2x1
jax: 0.10.0
libtpu: 0.0.40
codegen_flags: <defaults>
</compile_context>

<pallas_src>
from typing import NamedTuple

import jax
import jax.numpy as jnp
from jax.experimental import pallas as pl
from jax.experimental.pallas import tpu as pltpu

LANE = 128                                    # TPU lane width; Cout padded to this
_TAPS9 = tuple((di, dj) for di in range(3) for dj in range(3))
_TAPS4 = ((0, 0), (0, 1), (1, 0), (1, 1))


class _LayerCfg(NamedTuple):
    h: int
    w: int
    cin: int
    cout: int
    stride: int
    oh: int
    ow: int
    pad_t: int
    pad_b: int
    pad_l: int
    pad_r: int


def _tf_same(size, k, stride):
    """TF-style 'SAME': out = ceil(size/stride), extra padding on the high side."""
    out = -(-size // stride)
    pad = max((out - 1) * stride + k - size, 0)
    return out, pad // 2, pad - pad // 2


def _make_cfgs(h, w, cin, couts, strides):
    cfgs = []
    for cout, s in zip(couts, strides):
        oh, pt, pb = _tf_same(h, 3, s)
        ow, pleft, pright = _tf_same(w, 3, s)
        cfgs.append(_LayerCfg(h, w, cin, cout, s, oh, ow, pt, pb, pleft, pright))
        h, w, cin = oh, ow, cout
    return tuple(cfgs)


# ------------------------------ Pallas kernel ------------------------------ #
def _make_stem_kernel(cfgs):
    c1, c2, c3 = cfgs

    def _conv_s2(src_ref, t_ref, w_ref, shift, cfg):
        """Stride-2 3x3 conv on a space-to-depth padded source:
        4 contiguous tap copies -> one (oh*ow, 16*cin) x (16*cin, 128) MXU dot."""
        oh, ow, cin4 = cfg.oh, cfg.ow, 4 * cfg.cin
        for t, (ti, tj) in enumerate(_TAPS4):
            t_ref[:, :, t * cin4:(t + 1) * cin4] = src_ref[ti:ti + oh, tj:tj + ow, :]
        col = t_ref[...].reshape(oh * ow, 4 * cin4)
        y = jnp.dot(col, w_ref[...], preferred_element_type=jnp.float32)
        return jnp.maximum(y + shift, 0.0)                 # folded bias+BN, ReLU

    def _conv_s1(src_ref, t_ref, w_ref, shift, cfg):
        """Stride-1 3x3 conv on a plain padded source:
        9 contiguous tap copies -> one (oh*ow, 9*cin) x (9*cin, 128) MXU dot."""
        oh, ow, cin = cfg.oh, cfg.ow, cfg.cin
        for t, (di, dj) in enumerate(_TAPS9):
            t_ref[:, :, t * cin:(t + 1) * cin] = src_ref[di:di + oh, dj:dj + ow, :]
        col = t_ref[...].reshape(oh * ow, 9 * cin)
        y = jnp.dot(col, w_ref[...], preferred_element_type=jnp.float32)
        return jnp.maximum(y + shift, 0.0)

    def _zero_halo_sd(a_ref, h_in, w_in, pt, plft, cin):
        """Zero only the padding ring of a space-to-depth padded buffer
        (the interior is fully overwritten by the scatter each step)."""
        rh, ch, _ = a_ref.shape
        halo_rows = list(range(0, pt)) + list(range(pt + h_in, 2 * rh))
        halo_cols = list(range(0, plft)) + list(range(plft + w_in, 2 * ch))
        for r in halo_rows:          # one logical padded row across both col parities
            lo = (r % 2) * 2 * cin
            a_ref[r // 2:r // 2 + 1, :, lo:lo + 2 * cin] = (
                jnp.zeros((1, ch, 2 * cin), jnp.float32))
        for c in halo_cols:          # one logical padded column, both row parities
            for pr in range(2):
                lo = (pr * 2 + (c % 2)) * cin
                a_ref[:, c // 2:c // 2 + 1, lo:lo + cin] = (
                    jnp.zeros((rh, 1, cin), jnp.float32))

    def _scatter_sd(y, a_ref, h_out, w_out, cin, pt, plft):
        """Write y (h_out*w_out, 128) into the interior of the next layer's
        space-to-depth padded VMEM buffer: 4 parity block stores."""
        yr = y.reshape(h_out // 2, 2, w_out // 2, 2, LANE)
        for pr in range(2):
            for pc in range(2):
                dpr, dr0 = (pr + pt) % 2, (pr + pt) // 2
                dpc, dc0 = (pc + plft) % 2, (pc + plft) // 2
                slot = dpr * 2 + dpc
                a_ref[dr0:dr0 + h_out // 2, dc0:dc0 + w_out // 2,
                      slot * cin:(slot + 1) * cin] = yr[:, pr, :, pc, :cin]

    def kernel(x_ref, w1_ref, w2_ref, w3_ref, sh_ref, o_ref,
               a2_ref, a3_ref, t1_ref, t2_ref, t3_ref):
        # ---- Layer 1 (stride 2) on the host-padded, space-to-depth input ----
        y1 = _conv_s2(x_ref, t1_ref, w1_ref, sh_ref[0:1, :], c1)

        # Scatter into layer 2's space-to-depth padded buffer; zero halo only.
        _zero_halo_sd(a2_ref, c2.h, c2.w, c2.pad_t, c2.pad_l, c2.cin)
        _scatter_sd(y1, a2_ref, c1.oh, c1.ow, c1.cout, c2.pad_t, c2.pad_l)

        # ---- Layer 2 (stride 2) ----
        y2 = _conv_s2(a2_ref, t2_ref, w2_ref, sh_ref[1:2, :], c2)

        # Scatter into layer 3's plain padded buffer (stride-1 consumer).
        hp3, wp3, _ = a3_ref.shape
        if c3.pad_t:
            a3_ref[0:c3.pad_t, :, :] = jnp.zeros((c3.pad_t, wp3, c3.cin), jnp.float32)
        if c3.pad_b:
            a3_ref[c3.pad_t + c3.h:hp3, :, :] = (
                jnp.zeros((hp3 - c3.pad_t - c3.h, wp3, c3.cin), jnp.float32))
        if c3.pad_l:
            a3_ref[:, 0:c3.pad_l, :] = jnp.zeros((hp3, c3.pad_l, c3.cin), jnp.float32)
        if c3.pad_r:
            a3_ref[:, c3.pad_l + c3.w:wp3, :] = (
                jnp.zeros((hp3, wp3 - c3.pad_l - c3.w, c3.cin), jnp.float32))
        a3_ref[c3.pad_t:c3.pad_t + c3.h, c3.pad_l:c3.pad_l + c3.w, :] = (
            y2.reshape(c2.oh, c2.ow, LANE)[:, :, :c2.cout])

        # ---- Layer 3 (stride 1) -> single lane-dense (oh*ow, 128) store ----
        y3 = _conv_s1(a3_ref, t3_ref, w3_ref, sh_ref[2:3, :], c3)
        o_ref[...] = y3.astype(o_ref.dtype)

    return kernel


# ------------------------------ host wrapper ------------------------------- #
def _fold_bn(layer_params, eps):
    """Fold conv bias + eval-mode BN: returns scaled HWIO weight and shift."""
    w, b, gamma, beta, mean, var = layer_params
    scale = gamma / jnp.sqrt(var + eps)                       # (cout,)
    shift = b * scale + beta - mean * scale
    w_hwio = jnp.transpose(w, (2, 3, 1, 0)) * scale           # (3,3,cin,cout)
    return w_hwio, shift


def _pack_w_s2(w_hwio):
    """Stride-2 weight, matched to the space-to-depth im2col layout:
    rows ordered (ti, tj, pr, pc, cin); di=2*ti+pr, dj=2*tj+pc (di/dj==3 -> 0)."""
    kh, kw, cin, cout = w_hwio.shape
    w4 = jnp.pad(w_hwio, ((0, 1), (0, 1), (0, 0), (0, 0)))    # (4,4,cin,cout)
    w4 = w4.reshape(2, 2, 2, 2, cin, cout)                    # (ti,pr,tj,pc,cin,cout)
    w4 = jnp.transpose(w4, (0, 2, 1, 3, 4, 5))                # (ti,tj,pr,pc,cin,cout)
    wk = w4.reshape(16 * cin, cout)
    return jnp.pad(wk, ((0, 0), (0, LANE - cout))).astype(jnp.float32)


def _pack_w_s1(w_hwio):
    """Stride-1 weight: rows ordered (di, dj, cin)."""
    kh, kw, cin, cout = w_hwio.shape
    wk = w_hwio.reshape(9 * cin, cout)
    return jnp.pad(wk, ((0, 0), (0, LANE - cout))).astype(jnp.float32)


def stem_block3_forward(x_nchw, params_list, strides=(2, 2, 1), eps=1e-5):
    assert tuple(strides) == (2, 2, 1)
    n, c0, h, w = x_nchw.shape
    couts = [int(p[0].shape[0]) for p in params_list]
    cfgs = _make_cfgs(h, w, c0, couts, strides)
    c1, c2, c3 = cfgs
    # Parity scatter of the layer-1 output requires an even layer-1 output size.
    assert c1.oh % 2 == 0 and c1.ow % 2 == 0, "layer-1 output must be even-sized"

    # --- host: TF-SAME pad + space-to-depth the raw image for layer 1 -------
    x_nhwc = jnp.transpose(x_nchw, (0, 2, 3, 1))
    hp1, wp1 = 2 * (c1.oh + 1), 2 * (c1.ow + 1)               # even, covers all taps
    x_pad = jnp.pad(x_nhwc, ((0, 0),
                             (c1.pad_t, hp1 - h - c1.pad_t),
                             (c1.pad_l, wp1 - w - c1.pad_l),
                             (0, 0)))
    x_s2d = x_pad.reshape(n, hp1 // 2, 2, wp1 // 2, 2, c0)
    x_s2d = jnp.transpose(x_s2d, (0, 1, 3, 2, 4, 5)).reshape(n, hp1 // 2, wp1 // 2, 4 * c0)

    # --- host: fold BN/bias, pack weights to match the in-kernel im2col -----
    wk, shifts = [], []
    for p, cfg in zip(params_list, cfgs):
        w_hwio, shift = _fold_bn(p, eps)
        wk.append(_pack_w_s2(w_hwio) if cfg.stride == 2 else _pack_w_s1(w_hwio))
        shifts.append(jnp.pad(shift, (0, LANE - shift.shape[0])).astype(jnp.float32))
    w1, w2, w3 = wk
    sh = jnp.stack(shifts, axis=0)                            # (3, 128)

    m3 = c3.oh * c3.ow
    flops = 2 * n * LANE * (c1.oh * c1.ow * 16 * c1.cin
                            + c2.oh * c2.ow * 16 * c2.cin
                            + c3.oh * c3.ow * 9 * c3.cin)
    bytes_acc = 4 * (x_s2d.size + w1.size + w2.size + w3.size + sh.size + n * m3 * LANE)

    out = pl.pallas_call(
        _make_stem_kernel(cfgs),
        out_shape=jax.ShapeDtypeStruct((n, m3, LANE), jnp.float32),
        grid=(n,),
        in_specs=[
            pl.BlockSpec((None, c1.oh + 1, c1.ow + 1, 4 * c0), lambda i: (i, 0, 0, 0)),
            pl.BlockSpec(w1.shape, lambda i: (0, 0)),
            pl.BlockSpec(w2.shape, lambda i: (0, 0)),
            pl.BlockSpec(w3.shape, lambda i: (0, 0)),
            pl.BlockSpec(sh.shape, lambda i: (0, 0)),
        ],
        out_specs=pl.BlockSpec((None, m3, LANE), lambda i: (i, 0, 0)),
        scratch_shapes=[
            # layer-2 padded input, space-to-depth layout (channel-narrow: 4*C1)
            pltpu.VMEM((c2.oh + 1, c2.ow + 1, 4 * c2.cin), jnp.float32),
            # layer-3 padded input, plain layout (channel-narrow: C2)
            pltpu.VMEM((c3.h + c3.pad_t + c3.pad_b,
                        c3.w + c3.pad_l + c3.pad_r, c3.cin), jnp.float32),
            # im2col buffers (lane-dense contraction dims)
            pltpu.VMEM((c1.oh, c1.ow, 16 * c1.cin), jnp.float32),
            pltpu.VMEM((c2.oh, c2.ow, 16 * c2.cin), jnp.float32),
            pltpu.VMEM((c3.oh, c3.ow, 9 * c3.cin), jnp.float32),
        ],
        compiler_params=pltpu.CompilerParams(
            dimension_semantics=("parallel",),
            vmem_limit_bytes=32 * 1024 * 1024),
        cost_estimate=pl.CostEstimate(flops=int(flops), transcendentals=0,
                                      bytes_accessed=int(bytes_acc)),
    )(x_s2d, w1, w2, w3, sh)

    y = out[:, :, :c3.cout].reshape(n, c3.oh, c3.ow, c3.cout)  # drop lane padding
    return jnp.transpose(y, (0, 3, 1, 2))                      # NHWC -> NCHW


class StemBlock3:
    """Pallas/JAX port of StemBlock_3 (3 x Conv2D_BN, output stride 4, eval-mode BN,
    ReLU activation)."""

    def __init__(self, in_channels_list, out_channels_list, key):
        self.out_channels_list = out_channels_list
        self.strides = (2, 2, 1)
        self.params = []
        for cin, cout in zip(in_channels_list, out_channels_list):
            key, kw, kb, kg, kbe, km, kv = jax.random.split(key, 7)
            wgt = 0.1 * jax.random.normal(kw, (cout, cin, 3, 3), jnp.float32)
            b = 0.1 * jax.random.normal(kb, (cout,), jnp.float32)
            gamma = 1.0 + 0.1 * jax.random.normal(kg, (cout,), jnp.float32)
            beta = 0.1 * jax.random.normal(kbe, (cout,), jnp.float32)
            mean = 0.1 * jax.random.normal(km, (cout,), jnp.float32)
            var = 0.5 + jax.random.uniform(kv, (cout,), jnp.float32)
            self.params.append((wgt, b, gamma, beta, mean, var))
        strides = self.strides
        self._fwd = jax.jit(lambda x, p: stem_block3_forward(x, p, strides))

    def __call__(self, x_nchw):
        return self._fwd(x_nchw, self.params)

    def getOutputChannels(self):
        return self.out_channels_list[-1]

    def getOutputStride(self):
        return 4


# --------------------------- pure-JAX reference ---------------------------- #
def _reference(x_nchw, params_list, strides, eps=1e-5):
    x = jnp.transpose(x_nchw, (0, 2, 3, 1))
    for (w, b, gamma, beta, mean, var), s in zip(params_list, strides):
        w_hwio = jnp.transpose(w, (2, 3, 1, 0))
        y = jax.lax.conv_general_dilated(
            x, w_hwio, window_strides=(s, s), padding="SAME",
            dimension_numbers=("NHWC", "HWIO", "NHWC"))
        y = y + b
        y = (y - mean) / jnp.sqrt(var + eps) * gamma + beta
        x = jnp.maximum(y, 0.0)
    return jnp.transpose(x, (0, 3, 1, 2))


if __name__ == "__main__":
    key = jax.random.PRNGKey(0)
    k_in, k_params = jax.random.split(key)

    in_channels_list = [4, 8, 16]
    out_channels_list = [8, 16, 32]

    x = jax.random.normal(k_in, (2, 4, 16, 16), jnp.float32)   # NCHW, like PyTorch

    block = StemBlock3(in_channels_list, out_channels_list, k_params)
    out = jax.block_until_ready(block(x))
    assert out.shape == (2, 32, 4, 4), out.shape               # output stride 4

    ref = jax.block_until_ready(_reference(x, block.params, block.strides))
    max_err = float(jnp.max(jnp.abs(out - ref)))
    assert jnp.allclose(out, ref, atol=5e-4, rtol=5e-4), max_err

    print("KERNEL_OK")
</pallas_src>

<mosaic_0001>
module attributes {stable_mosaic.version = 11 : i64} {
  func.func @kernel(%arg0: i32, %arg1: memref<1x9x9x16xf32, #tpu.memory_space<vmem>>, %arg2: memref<64x128xf32, #tpu.memory_space<vmem>>, %arg3: memref<128x128xf32, #tpu.memory_space<vmem>>, %arg4: memref<144x128xf32, #tpu.memory_space<vmem>>, %arg5: memref<3x128xf32, #tpu.memory_space<vmem>>, %arg6: memref<1x16x128xf32, #tpu.memory_space<vmem>>, %arg7: memref<5x5x32xf32, #tpu.memory_space<vmem>>, %arg8: memref<6x6x16xf32, #tpu.memory_space<vmem>>, %arg9: memref<8x8x64xf32, #tpu.memory_space<vmem>>, %arg10: memref<4x4x128xf32, #tpu.memory_space<vmem>>, %arg11: memref<4x4x144xf32, #tpu.memory_space<vmem>>) attributes {dimension_semantics = [#tpu.dimension_semantics<parallel>], iteration_bounds = array<i64: 2>, scalar_prefetch = 0 : i64, scratch_operands = 5 : i64, tpu.core_type = #tpu.core_type<tc>, window_params = [{transform_indices = @transform_0, window_bounds = array<i64: 1, 9, 9, 16>}, {pipeline_mode = #tpu.pipeline_mode<synchronous>, transform_indices = @transform_1, window_bounds = array<i64: 64, 128>}, {pipeline_mode = #tpu.pipeline_mode<synchronous>, transform_indices = @transform_2, window_bounds = array<i64: 128, 128>}, {pipeline_mode = #tpu.pipeline_mode<synchronous>, transform_indices = @transform_3, window_bounds = array<i64: 144, 128>}, {pipeline_mode = #tpu.pipeline_mode<synchronous>, transform_indices = @transform_4, window_bounds = array<i64: 3, 128>}, {transform_indices = @transform_5, window_bounds = array<i64: 1, 16, 128>}]} {
    %c0 = arith.constant 0 : index
    %c0_0 = arith.constant 0 : index
    %0 = vector.load %arg5[%c0, %c0_0] : memref<3x128xf32, #tpu.memory_space<vmem>>, vector<1x128xf32>
    %c0_1 = arith.constant 0 : index
    %c0_2 = arith.constant 0 : index
    %c0_3 = arith.constant 0 : index
    %c0_4 = arith.constant 0 : index
    %1 = vector.load %arg1[%c0_1, %c0_2, %c0_3, %c0_4] : memref<1x9x9x16xf32, #tpu.memory_space<vmem>>, vector<1x8x8x16xf32>
    %2 = vector.shape_cast %1 : vector<1x8x8x16xf32> to vector<8x8x16xf32>
    %c0_5 = arith.constant 0 : index
    %c0_6 = arith.constant 0 : index
    %c0_7 = arith.constant 0 : index
    %3 = vector.load %arg9[%c0_5, %c0_6, %c0_7] : memref<8x8x64xf32, #tpu.memory_space<vmem>>, vector<8x8x16xf32>
    tpu.vector_store %arg9[%c0_5, %c0_6, %c0_7], %2 {strides = array<i32>} : memref<8x8x64xf32, #tpu.memory_space<vmem>>, vector<8x8x16xf32>,
    %c0_8 = arith.constant 0 : index
    %c0_9 = arith.constant 0 : index
    %c1 = arith.constant 1 : index
    %c0_10 = arith.constant 0 : index
    %4 = vector.load %arg1[%c0_8, %c0_9, %c1, %c0_10] : memref<1x9x9x16xf32, #tpu.memory_space<vmem>>, vector<1x8x8x16xf32>
    %5 = vector.shape_cast %4 : vector<1x8x8x16xf32> to vector<8x8x16xf32>
    %c0_11 = arith.constant 0 : index
    %c0_12 = arith.constant 0 : index
    %c16 = arith.constant 16 : index
    %6 = vector.load %arg9[%c0_11, %c0_12, %c16] : memref<8x8x64xf32, #tpu.memory_space<vmem>>, vector<8x8x16xf32>
    tpu.vector_store %arg9[%c0_11, %c0_12, %c16], %5 {strides = array<i32>} : memref<8x8x64xf32, #tpu.memory_space<vmem>>, vector<8x8x16xf32>,
    %c0_13 = arith.constant 0 : index
    %c1_14 = arith.constant 1 : index
    %c0_15 = arith.constant 0 : index
    %c0_16 = arith.constant 0 : index
    %7 = vector.load %arg1[%c0_13, %c1_14, %c0_15, %c0_16] : memref<1x9x9x16xf32, #tpu.memory_space<vmem>>, vector<1x8x8x16xf32>
    %8 = vector.shape_cast %7 : vector<1x8x8x16xf32> to vector<8x8x16xf32>
    %c0_17 = arith.constant 0 : index
    %c0_18 = arith.constant 0 : index
    %c32 = arith.constant 32 : index
    %9 = vector.load %arg9[%c0_17, %c0_18, %c32] : memref<8x8x64xf32, #tpu.memory_space<vmem>>, vector<8x8x16xf32>
    tpu.vector_store %arg9[%c0_17, %c0_18, %c32], %8 {strides = array<i32>} : memref<8x8x64xf32, #tpu.memory_space<vmem>>, vector<8x8x16xf32>,
    %c0_19 = arith.constant 0 : index
    %c1_20 = arith.constant 1 : index
    %c1_21 = arith.constant 1 : index
    %c0_22 = arith.constant 0 : index
    %10 = vector.load %arg1[%c0_19, %c1_20, %c1_21, %c0_22] : memref<1x9x9x16xf32, #tpu.memory_space<vmem>>, vector<1x8x8x16xf32>
    %11 = vector.shape_cast %10 : vector<1x8x8x16xf32> to vector<8x8x16xf32>
    %c0_23 = arith.constant 0 : index
    %c0_24 = arith.constant 0 : index
    %c48 = arith.constant 48 : index
    %12 = vector.load %arg9[%c0_23, %c0_24, %c48] : memref<8x8x64xf32, #tpu.memory_space<vmem>>, vector<8x8x16xf32>
    tpu.vector_store %arg9[%c0_23, %c0_24, %c48], %11 {strides = array<i32>} : memref<8x8x64xf32, #tpu.memory_space<vmem>>, vector<8x8x16xf32>,
    %c0_25 = arith.constant 0 : index
    %c0_26 = arith.constant 0 : index
    %c0_27 = arith.constant 0 : index
    %13 = vector.load %arg9[%c0_25, %c0_26, %c0_27] : memref<8x8x64xf32, #tpu.memory_space<vmem>>, vector<8x8x64xf32>
    %14 = vector.shape_cast %13 : vector<8x8x64xf32> to vector<64x64xf32>
    %c0_28 = arith.constant 0 : index
    %c0_29 = arith.constant 0 : index
    %15 = vector.load %arg2[%c0_28, %c0_29] : memref<64x128xf32, #tpu.memory_space<vmem>>, vector<64x128xf32>
    %cst = arith.constant dense<0.000000e+00> : vector<64x128xf32>
    %16 = tpu.matmul %14, %15, %cst {dimension_numbers = #tpu.dot_dimension_numbers<[1], [0], [0], [1], [0, 0, 1, 1], [], []>} : vector<64x64xf32>, vector<64x128xf32>, vector<64x128xf32> -> vector<64x128xf32>
    %17 = vector.broadcast %0 : vector<1x128xf32> to vector<64x128xf32>
    %18 = arith.addf %16, %17 : vector<64x128xf32>
    %cst_30 = arith.constant 0.000000e+00 : f32
    %19 = vector.broadcast %cst_30 : f32 to vector<64x128xf32>
    %20 = arith.maximumf %18, %19 : vector<64x128xf32>
    %cst_31 = arith.constant 0.000000e+00 : f32
    %21 = vector.broadcast %cst_31 : f32 to vector<1x5x16xf32>
    %c4 = arith.constant 4 : index
    %c0_32 = arith.constant 0 : index
    %c0_33 = arith.constant 0 : index
    %22 = vector.load %arg7[%c4, %c0_32, %c0_33] : memref<5x5x32xf32, #tpu.memory_space<vmem>>, vector<1x5x16xf32>
    tpu.vector_store %arg7[%c4, %c0_32, %c0_33], %21 {strides = array<i32>} : memref<5x5x32xf32, #tpu.memory_space<vmem>>, vector<1x5x16xf32>,
    %cst_34 = arith.constant 0.000000e+00 : f32
    %23 = vector.broadcast %cst_34 : f32 to vector<1x5x16xf32>
    %c4_35 = arith.constant 4 : index
    %c0_36 = arith.constant 0 : index
    %c16_37 = arith.constant 16 : index
    %24 = vector.load %arg7[%c4_35, %c0_36, %c16_37] : memref<5x5x32xf32, #tpu.memory_space<vmem>>, vector<1x5x16xf32>
    tpu.vector_store %arg7[%c4_35, %c0_36, %c16_37], %23 {strides = array<i32>} : memref<5x5x32xf32, #tpu.memory_space<vmem>>, vector<1x5x16xf32>,
    %cst_38 = arith.constant 0.000000e+00 : f32
    %25 = vector.broadcast %cst_38 : f32 to vector<5x1x8xf32>
    %c0_39 = arith.constant 0 : index
    %c4_40 = arith.constant 4 : index
    %c0_41 = arith.constant 0 : index
    %26 = vector.load %arg7[%c0_39, %c4_40, %c0_41] : memref<5x5x32xf32, #tpu.memory_space<vmem>>, vector<5x1x8xf32>
    tpu.vector_store %arg7[%c0_39, %c4_40, %c0_41], %25 {strides = array<i32>} : memref<5x5x32xf32, #tpu.memory_space<vmem>>, vector<5x1x8xf32>,
    %cst_42 = arith.constant 0.000000e+00 : f32
    %27 = vector.broadcast %cst_42 : f32 to vector<5x1x8xf32>
    %c0_43 = arith.constant 0 : index
    %c4_44 = arith.constant 4 : index
    %c16_45 = arith.constant 16 : index
    %28 = vector.load %arg7[%c0_43, %c4_44, %c16_45] : memref<5x5x32xf32, #tpu.memory_space<vmem>>, vector<5x1x8xf32>
    tpu.vector_store %arg7[%c0_43, %c4_44, %c16_45], %27 {strides = array<i32>} : memref<5x5x32xf32, #tpu.memory_space<vmem>>, vector<5x1x8xf32>,
    %cst_46 = arith.constant 0.000000e+00 : f32
    %29 = vector.broadcast %cst_46 : f32 to vector<5x1x8xf32>
    %c0_47 = arith.constant 0 : index
    %c4_48 = arith.constant 4 : index
    %c8 = arith.constant 8 : index
    %30 = vector.load %arg7[%c0_47, %c4_48, %c8] : memref<5x5x32xf32, #tpu.memory_space<vmem>>, vector<5x1x8xf32>
    tpu.vector_store %arg7[%c0_47, %c4_48, %c8], %29 {strides = array<i32>} : memref<5x5x32xf32, #tpu.memory_space<vmem>>, vector<5x1x8xf32>,
    %cst_49 = arith.constant 0.000000e+00 : f32
    %31 = vector.broadcast %cst_49 : f32 to vector<5x1x8xf32>
    %c0_50 = arith.constant 0 : index
    %c4_51 = arith.constant 4 : index
    %c24 = arith.constant 24 : index
    %32 = vector.load %arg7[%c0_50, %c4_51, %c24] : memref<5x5x32xf32, #tpu.memory_space<vmem>>, vector<5x1x8xf32>
    tpu.vector_store %arg7[%c0_50, %c4_51, %c24], %31 {strides = array<i32>} : memref<5x5x32xf32, #tpu.memory_space<vmem>>, vector<5x1x8xf32>,
    %33 = vector.shape_cast %20 : vector<64x128xf32> to vector<4x2x4x2x128xf32>
    %34 = vector.extract_strided_slice %33 {offsets = [0, 0, 0, 0, 0], sizes = [4, 1, 4, 1, 8], strides = [1, 1, 1, 1, 1]} : vector<4x2x4x2x128xf32> to vector<4x1x4x1x8xf32>
    %35 = vector.shape_cast %34 : vector<4x1x4x1x8xf32> to vector<4x4x8xf32>
    %c0_52 = arith.constant 0 : index
    %c0_53 = arith.constant 0 : index
    %c0_54 = arith.constant 0 : index
    %36 = vector.load %arg7[%c0_52, %c0_53, %c0_54] : memref<5x5x32xf32, #tpu.memory_space<vmem>>, vector<4x4x8xf32>
    tpu.vector_store %arg7[%c0_52, %c0_53, %c0_54], %35 {strides = array<i32>} : memref<5x5x32xf32, #tpu.memory_space<vmem>>, vector<4x4x8xf32>,
    %37 = vector.extract_strided_slice %33 {offsets = [0, 0, 0, 1, 0], sizes = [4, 1, 4, 1, 8], strides = [1, 1, 1, 1, 1]} : vector<4x2x4x2x128xf32> to vector<4x1x4x1x8xf32>
    %38 = vector.shape_cast %37 : vector<4x1x4x1x8xf32> to vector<4x4x8xf32>
    %c0_55 = arith.constant 0 : index
    %c0_56 = arith.constant 0 : index
    %c8_57 = arith.constant 8 : index
    %39 = vector.load %arg7[%c0_55, %c0_56, %c8_57] : memref<5x5x32xf32, #tpu.memory_space<vmem>>, vector<4x4x8xf32>
    tpu.vector_store %arg7[%c0_55, %c0_56, %c8_57], %38 {strides = array<i32>} : memref<5x5x32xf32, #tpu.memory_space<vmem>>, vector<4x4x8xf32>,
    %40 = vector.extract_strided_slice %33 {offsets = [0, 1, 0, 0, 0], sizes = [4, 1, 4, 1, 8], strides = [1, 1, 1, 1, 1]} : vector<4x2x4x2x128xf32> to vector<4x1x4x1x8xf32>
    %41 = vector.shape_cast %40 : vector<4x1x4x1x8xf32> to vector<4x4x8xf32>
    %c0_58 = arith.constant 0 : index
    %c0_59 = arith.constant 0 : index
    %c16_60 = arith.constant 16 : index
    %42 = vector.load %arg7[%c0_58, %c0_59, %c16_60] : memref<5x5x32xf32, #tpu.memory_space<vmem>>, vector<4x4x8xf32>
    tpu.vector_store %arg7[%c0_58, %c0_59, %c16_60], %41 {strides = array<i32>} : memref<5x5x32xf32, #tpu.memory_space<vmem>>, vector<4x4x8xf32>,
    %43 = vector.extract_strided_slice %33 {offsets = [0, 1, 0, 1, 0], sizes = [4, 1, 4, 1, 8], strides = [1, 1, 1, 1, 1]} : vector<4x2x4x2x128xf32> to vector<4x1x4x1x8xf32>
    %44 = vector.shape_cast %43 : vector<4x1x4x1x8xf32> to vector<4x4x8xf32>
    %c0_61 = arith.constant 0 : index
    %c0_62 = arith.constant 0 : index
    %c24_63 = arith.constant 24 : index
    %45 = vector.load %arg7[%c0_61, %c0_62, %c24_63] : memref<5x5x32xf32, #tpu.memory_space<vmem>>, vector<4x4x8xf32>
    tpu.vector_store %arg7[%c0_61, %c0_62, %c24_63], %44 {strides = array<i32>} : memref<5x5x32xf32, #tpu.memory_space<vmem>>, vector<4x4x8xf32>,
    %c1_64 = arith.constant 1 : index
    %c0_65 = arith.constant 0 : index
    %46 = vector.load %arg5[%c1_64, %c0_65] : memref<3x128xf32, #tpu.memory_space<vmem>>, vector<1x128xf32>
    %c0_66 = arith.constant 0 : index
    %c0_67 = arith.constant 0 : index
    %c0_68 = arith.constant 0 : index
    %47 = vector.load %arg7[%c0_66, %c0_67, %c0_68] : memref<5x5x32xf32, #tpu.memory_space<vmem>>, vector<4x4x32xf32>
    %c0_69 = arith.constant 0 : index
    %c0_70 = arith.constant 0 : index
    %c0_71 = arith.constant 0 : index
    %48 = vector.load %arg10[%c0_69, %c0_70, %c0_71] : memref<4x4x128xf32, #tpu.memory_space<vmem>>, vector<4x4x32xf32>
    tpu.vector_store %arg10[%c0_69, %c0_70, %c0_71], %47 {strides = array<i32>} : memref<4x4x128xf32, #tpu.memory_space<vmem>>, vector<4x4x32xf32>,
    %c0_72 = arith.constant 0 : index
    %c1_73 = arith.constant 1 : index
    %c0_74 = arith.constant 0 : index
    %49 = vector.load %arg7[%c0_72, %c1_73, %c0_74] : memref<5x5x32xf32, #tpu.memory_space<vmem>>, vector<4x4x32xf32>
    %c0_75 = arith.constant 0 : index
    %c0_76 = arith.constant 0 : index
    %c32_77 = arith.constant 32 : index
    %50 = vector.load %arg10[%c0_75, %c0_76, %c32_77] : memref<4x4x128xf32, #tpu.memory_space<vmem>>, vector<4x4x32xf32>
    tpu.vector_store %arg10[%c0_75, %c0_76, %c32_77], %49 {strides = array<i32>} : memref<4x4x128xf32, #tpu.memory_space<vmem>>, vector<4x4x32xf32>,
    %c1_78 = arith.constant 1 : index
    %c0_79 = arith.constant 0 : index
    %c0_80 = arith.constant 0 : index
    %51 = vector.load %arg7[%c1_78, %c0_79, %c0_80] : memref<5x5x32xf32, #tpu.memory_space<vmem>>, vector<4x4x32xf32>
    %c0_81 = arith.constant 0 : index
    %c0_82 = arith.constant 0 : index
    %c64 = arith.constant 64 : index
    %52 = vector.load %arg10[%c0_81, %c0_82, %c64] : memref<4x4x128xf32, #tpu.memory_space<vmem>>, vector<4x4x32xf32>
    tpu.vector_store %arg10[%c0_81, %c0_82, %c64], %51 {strides = array<i32>} : memref<4x4x128xf32, #tpu.memory_space<vmem>>, vector<4x4x32xf32>,
    %c1_83 = arith.constant 1 : index
    %c1_84 = arith.constant 1 : index
    %c0_85 = arith.constant 0 : index
    %53 = vector.load %arg7[%c1_83, %c1_84, %c0_85] : memref<5x5x32xf32, #tpu.memory_space<vmem>>, vector<4x4x32xf32>
    %c0_86 = arith.constant 0 : index
    %c0_87 = arith.constant 0 : index
    %c96 = arith.constant 96 : index
    %54 = vector.load %arg10[%c0_86, %c0_87, %c96] : memref<4x4x128xf32, #tpu.memory_space<vmem>>, vector<4x4x32xf32>
    tpu.vector_store %arg10[%c0_86, %c0_87, %c96], %53 {strides = array<i32>} : memref<4x4x128xf32, #tpu.memory_space<vmem>>, vector<4x4x32xf32>,
    %c0_88 = arith.constant 0 : index
    %c0_89 = arith.constant 0 : index
    %c0_90 = arith.constant 0 : index
    %55 = vector.load %arg10[%c0_88, %c0_89, %c0_90] : memref<4x4x128xf32, #tpu.memory_space<vmem>>, vector<4x4x128xf32>
    %56 = vector.shape_cast %55 : vector<4x4x128xf32> to vector<16x128xf32>
    %c0_91 = arith.constant 0 : index
    %c0_92 = arith.constant 0 : index
    %57 = vector.load %arg3[%c0_91, %c0_92] : memref<128x128xf32, #tpu.memory_space<vmem>>, vector<128x128xf32>
    %cst_93 = arith.constant dense<0.000000e+00> : vector<16x128xf32>
    %58 = tpu.matmul %56, %57, %cst_93 {dimension_numbers = #tpu.dot_dimension_numbers<[1], [0], [0], [1], [0, 0, 1, 1], [], []>} : vector<16x128xf32>, vector<128x128xf32>, vector<16x128xf32> -> vector<16x128xf32>
    %59 = vector.broadcast %46 : vector<1x128xf32> to vector<16x128xf32>
    %60 = arith.addf %58, %59 : vector<16x128xf32>
    %cst_94 = arith.constant 0.000000e+00 : f32
    %61 = vector.broadcast %cst_94 : f32 to vector<16x128xf32>
    %62 = arith.maximumf %60, %61 : vector<16x128xf32>
    %cst_95 = arith.constant 0.000000e+00 : f32
    %63 = vector.broadcast %cst_95 : f32 to vector<1x6x16xf32>
    %c0_96 = arith.constant 0 : index
    %c0_97 = arith.constant 0 : index
    %c0_98 = arith.constant 0 : index
    %64 = vector.load %arg8[%c0_96, %c0_97, %c0_98] : memref<6x6x16xf32, #tpu.memory_space<vmem>>, vector<1x6x16xf32>
    tpu.vector_store %arg8[%c0_96, %c0_97, %c0_98], %63 {strides = array<i32>} : memref<6x6x16xf32, #tpu.memory_space<vmem>>, vector<1x6x16xf32>,
    %cst_99 = arith.constant 0.000000e+00 : f32
    %65 = vector.broadcast %cst_99 : f32 to vector<1x6x16xf32>
    %c5 = arith.constant 5 : index
    %c0_100 = arith.constant 0 : index
    %c0_101 = arith.constant 0 : index
    %66 = vector.load %arg8[%c5, %c0_100, %c0_101] : memref<6x6x16xf32, #tpu.memory_space<vmem>>, vector<1x6x16xf32>
    tpu.vector_store %arg8[%c5, %c0_100, %c0_101], %65 {strides = array<i32>} : memref<6x6x16xf32, #tpu.memory_space<vmem>>, vector<1x6x16xf32>,
    %cst_102 = arith.constant 0.000000e+00 : f32
    %67 = vector.broadcast %cst_102 : f32 to vector<6x1x16xf32>
    %c0_103 = arith.constant 0 : index
    %c0_104 = arith.constant 0 : index
    %c0_105 = arith.constant 0 : index
    %68 = vector.load %arg8[%c0_103, %c0_104, %c0_105] : memref<6x6x16xf32, #tpu.memory_space<vmem>>, vector<6x1x16xf32>
    tpu.vector_store %arg8[%c0_103, %c0_104, %c0_105], %67 {strides = array<i32>} : memref<6x6x16xf32, #tpu.memory_space<vmem>>, vector<6x1x16xf32>,
    %cst_106 = arith.constant 0.000000e+00 : f32
    %69 = vector.broadcast %cst_106 : f32 to vector<6x1x16xf32>
    %c0_107 = arith.constant 0 : index
    %c5_108 = arith.constant 5 : index
    %c0_109 = arith.constant 0 : index
    %70 = vector.load %arg8[%c0_107, %c5_108, %c0_109] : memref<6x6x16xf32, #tpu.memory_space<vmem>>, vector<6x1x16xf32>
    tpu.vector_store %arg8[%c0_107, %c5_108, %c0_109], %69 {strides = array<i32>} : memref<6x6x16xf32, #tpu.memory_space<vmem>>, vector<6x1x16xf32>,
    %71 = vector.shape_cast %62 : vector<16x128xf32> to vector<4x4x128xf32>
    %72 = vector.extract_strided_slice %71 {offsets = [0, 0, 0], sizes = [4, 4, 16], strides = [1, 1, 1]} : vector<4x4x128xf32> to vector<4x4x16xf32>
    %c1_110 = arith.constant 1 : index
    %c1_111 = arith.constant 1 : index
    %c0_112 = arith.constant 0 : index
    %73 = vector.load %arg8[%c1_110, %c1_111, %c0_112] : memref<6x6x16xf32, #tpu.memory_space<vmem>>, vector<4x4x16xf32>
    tpu.vector_store %arg8[%c1_110, %c1_111, %c0_112], %72 {strides = array<i32>} : memref<6x6x16xf32, #tpu.memory_space<vmem>>, vector<4x4x16xf32>,
    %c2 = arith.constant 2 : index
    %c0_113 = arith.constant 0 : index
    %74 = vector.load %arg5[%c2, %c0_113] : memref<3x128xf32, #tpu.memory_space<vmem>>, vector<1x128xf32>
    %c0_114 = arith.constant 0 : index
    %c0_115 = arith.constant 0 : index
    %c0_116 = arith.constant 0 : index
    %75 = vector.load %arg8[%c0_114, %c0_115, %c0_116] : memref<6x6x16xf32, #tpu.memory_space<vmem>>, vector<4x4x16xf32>
    %c0_117 = arith.constant 0 : index
    %c0_118 = arith.constant 0 : index
    %c0_119 = arith.constant 0 : index
    %76 = vector.load %arg11[%c0_117, %c0_118, %c0_119] : memref<4x4x144xf32, #tpu.memory_space<vmem>>, vector<4x4x16xf32>
    tpu.vector_store %arg11[%c0_117, %c0_118, %c0_119], %75 {strides = array<i32>} : memref<4x4x144xf32, #tpu.memory_space<vmem>>, vector<4x4x16xf32>,
    %c0_120 = arith.constant 0 : index
    %c1_121 = arith.constant 1 : index
    %c0_122 = arith.constant 0 : index
    %77 = vector.load %arg8[%c0_120, %c1_121, %c0_122] : memref<6x6x16xf32, #tpu.memory_space<vmem>>, vector<4x4x16xf32>
    %c0_123 = arith.constant 0 : index
    %c0_124 = arith.constant 0 : index
    %c16_125 = arith.constant 16 : index
    %78 = vector.load %arg11[%c0_123, %c0_124, %c16_125] : memref<4x4x144xf32, #tpu.memory_space<vmem>>, vector<4x4x16xf32>
    tpu.vector_store %arg11[%c0_123, %c0_124, %c16_125], %77 {strides = array<i32>} : memref<4x4x144xf32, #tpu.memory_space<vmem>>, vector<4x4x16xf32>,
    %c0_126 = arith.constant 0 : index
    %c2_127 = arith.constant 2 : index
    %c0_128 = arith.constant 0 : index
    %79 = vector.load %arg8[%c0_126, %c2_127, %c0_128] : memref<6x6x16xf32, #tpu.memory_space<vmem>>, vector<4x4x16xf32>
    %c0_129 = arith.constant 0 : index
    %c0_130 = arith.constant 0 : index
    %c32_131 = arith.constant 32 : index
    %80 = vector.load %arg11[%c0_129, %c0_130, %c32_131] : memref<4x4x144xf32, #tpu.memory_space<vmem>>, vector<4x4x16xf32>
    tpu.vector_store %arg11[%c0_129, %c0_130, %c32_131], %79 {strides = array<i32>} : memref<4x4x144xf32, #tpu.memory_space<vmem>>, vector<4x4x16xf32>,
    %c1_132 = arith.constant 1 : index
    %c0_133 = arith.constant 0 : index
    %c0_134 = arith.constant 0 : index
    %81 = vector.load %arg8[%c1_132, %c0_133, %c0_134] : memref<6x6x16xf32, #tpu.memory_space<vmem>>, vector<4x4x16xf32>
    %c0_135 = arith.constant 0 : index
    %c0_136 = arith.constant 0 : index
    %c48_137 = arith.constant 48 : index
    %82 = vector.load %arg11[%c0_135, %c0_136, %c48_137] : memref<4x4x144xf32, #tpu.memory_space<vmem>>, vector<4x4x16xf32>
    tpu.vector_store %arg11[%c0_135, %c0_136, %c48_137], %81 {strides = array<i32>} : memref<4x4x144xf32, #tpu.memory_space<vmem>>, vector<4x4x16xf32>,
    %c1_138 = arith.constant 1 : index
    %c1_139 = arith.constant 1 : index
    %c0_140 = arith.constant 0 : index
    %83 = vector.load %arg8[%c1_138, %c1_139, %c0_140] : memref<6x6x16xf32, #tpu.memory_space<vmem>>, vector<4x4x16xf32>
    %c0_141 = arith.constant 0 : index
    %c0_142 = arith.constant 0 : index
    %c64_143 = arith.constant 64 : index
    %84 = vector.load %arg11[%c0_141, %c0_142, %c64_143] : memref<4x4x144xf32, #tpu.memory_space<vmem>>, vector<4x4x16xf32>
    tpu.vector_store %arg11[%c0_141, %c0_142, %c64_143], %83 {strides = array<i32>} : memref<4x4x144xf32, #tpu.memory_space<vmem>>, vector<4x4x16xf32>,
    %c1_144 = arith.constant 1 : index
    %c2_145 = arith.constant 2 : index
    %c0_146 = arith.constant 0 : index
    %85 = vector.load %arg8[%c1_144, %c2_145, %c0_146] : memref<6x6x16xf32, #tpu.memory_space<vmem>>, vector<4x4x16xf32>
    %c0_147 = arith.constant 0 : index
    %c0_148 = arith.constant 0 : index
    %c80 = arith.constant 80 : index
    %86 = vector.load %arg11[%c0_147, %c0_148, %c80] : memref<4x4x144xf32, #tpu.memory_space<vmem>>, vector<4x4x16xf32>
    tpu.vector_store %arg11[%c0_147, %c0_148, %c80], %85 {strides = array<i32>} : memref<4x4x144xf32, #tpu.memory_space<vmem>>, vector<4x4x16xf32>,
    %c2_149 = arith.constant 2 : index
    %c0_150 = arith.constant 0 : index
    %c0_151 = arith.constant 0 : index
    %87 = vector.load %arg8[%c2_149, %c0_150, %c0_151] : memref<6x6x16xf32, #tpu.memory_space<vmem>>, vector<4x4x16xf32>
    %c0_152 = arith.constant 0 : index
    %c0_153 = arith.constant 0 : index
    %c96_154 = arith.constant 96 : index
    %88 = vector.load %arg11[%c0_152, %c0_153, %c96_154] : memref<4x4x144xf32, #tpu.memory_space<vmem>>, vector<4x4x16xf32>
    tpu.vector_store %arg11[%c0_152, %c0_153, %c96_154], %87 {strides = array<i32>} : memref<4x4x144xf32, #tpu.memory_space<vmem>>, vector<4x4x16xf32>,
    %c2_155 = arith.constant 2 : index
    %c1_156 = arith.constant 1 : index
    %c0_157 = arith.constant 0 : index
    %89 = vector.load %arg8[%c2_155, %c1_156, %c0_157] : memref<6x6x16xf32, #tpu.memory_space<vmem>>, vector<4x4x16xf32>
    %c0_158 = arith.constant 0 : index
    %c0_159 = arith.constant 0 : index
    %c112 = arith.constant 112 : index
    %90 = vector.load %arg11[%c0_158, %c0_159, %c112] : memref<4x4x144xf32, #tpu.memory_space<vmem>>, vector<4x4x16xf32>
    tpu.vector_store %arg11[%c0_158, %c0_159, %c112], %89 {strides = array<i32>} : memref<4x4x144xf32, #tpu.memory_space<vmem>>, vector<4x4x16xf32>,
    %c2_160 = arith.constant 2 : index
    %c2_161 = arith.constant 2 : index
    %c0_162 = arith.constant 0 : index
    %91 = vector.load %arg8[%c2_160, %c2_161, %c0_162] : memref<6x6x16xf32, #tpu.memory_space<vmem>>, vector<4x4x16xf32>
    %c0_163 = arith.constant 0 : index
    %c0_164 = arith.constant 0 : index
    %c128 = arith.constant 128 : index
    %92 = vector.load %arg11[%c0_163, %c0_164, %c128] : memref<4x4x144xf32, #tpu.memory_space<vmem>>, vector<4x4x16xf32>
    tpu.vector_store %arg11[%c0_163, %c0_164, %c128], %91 {strides = array<i32>} : memref<4x4x144xf32, #tpu.memory_space<vmem>>, vector<4x4x16xf32>,
    %c0_165 = arith.constant 0 : index
    %c0_166 = arith.constant 0 : index
    %c0_167 = arith.constant 0 : index
    %93 = vector.load %arg11[%c0_165, %c0_166, %c0_167] : memref<4x4x144xf32, #tpu.memory_space<vmem>>, vector<4x4x144xf32>
    %94 = vector.shape_cast %93 : vector<4x4x144xf32> to vector<16x144xf32>
    %c0_168 = arith.constant 0 : index
    %c0_169 = arith.constant 0 : index
    %95 = vector.load %arg4[%c0_168, %c0_169] : memref<144x128xf32, #tpu.memory_space<vmem>>, vector<144x128xf32>
    %cst_170 = arith.constant dense<0.000000e+00> : vector<16x128xf32>
    %96 = tpu.matmul %94, %95, %cst_170 {dimension_numbers = #tpu.dot_dimension_numbers<[1], [0], [0], [1], [0, 0, 1, 1], [], []>} : vector<16x144xf32>, vector<144x128xf32>, vector<16x128xf32> -> vector<16x128xf32>
    %97 = vector.broadcast %74 : vector<1x128xf32> to vector<16x128xf32>
    %98 = arith.addf %96, %97 : vector<16x128xf32>
    %cst_171 = arith.constant 0.000000e+00 : f32
    %99 = vector.broadcast %cst_171 : f32 to vector<16x128xf32>
    %100 = arith.maximumf %98, %99 : vector<16x128xf32>
    %c0_172 = arith.constant 0 : index
    %c0_173 = arith.constant 0 : index
    %c0_174 = arith.constant 0 : index
    %101 = vector.load %arg6[%c0_172, %c0_173, %c0_174] : memref<1x16x128xf32, #tpu.memory_space<vmem>>, vector<1x16x128xf32>
    %102 = vector.shape_cast %101 : vector<1x16x128xf32> to vector<16x128xf32>
    %103 = vector.shape_cast %100 : vector<16x128xf32> to vector<1x16x128xf32>
    tpu.vector_store %arg6[%c0_172, %c0_173, %c0_174], %103 {strides = array<i32>} : memref<1x16x128xf32, #tpu.memory_space<vmem>>, vector<1x16x128xf32>,
    return
  }
  func.func @transform_0(%arg0: i32) -> (i32, i32, i32, i32) {
    %c0_i32 = arith.constant 0 : i32
    %c0_i32_0 = arith.constant 0 : i32
    %c0_i32_1 = arith.constant 0 : i32
    %c0_i32_2 = arith.constant 0 : i32
    return %arg0, %c0_i32, %c0_i32_0, %c0_i32_1 : i32, i32, i32, i32
  }
  func.func @transform_1(%arg0: i32) -> (i32, i32) {
    %c0_i32 = arith.constant 0 : i32
    %c0_i32_0 = arith.constant 0 : i32
    %c0_i32_1 = arith.constant 0 : i32
    return %c0_i32, %c0_i32_0 : i32, i32
  }
  func.func @transform_2(%arg0: i32) -> (i32, i32) {
    %c0_i32 = arith.constant 0 : i32
    %c0_i32_0 = arith.constant 0 : i32
    %c0_i32_1 = arith.constant 0 : i32
    return %c0_i32, %c0_i32_0 : i32, i32
  }
  func.func @transform_3(%arg0: i32) -> (i32, i32) {
    %c0_i32 = arith.constant 0 : i32
    %c0_i32_0 = arith.constant 0 : i32
    %c0_i32_1 = arith.constant 0 : i32
    return %c0_i32, %c0_i32_0 : i32, i32
  }
  func.func @transform_4(%arg0: i32) -> (i32, i32) {
    %c0_i32 = arith.constant 0 : i32
    %c0_i32_0 = arith.constant 0 : i32
    %c0_i32_1 = arith.constant 0 : i32
    return %c0_i32, %c0_i32_0 : i32, i32
  }
  func.func @transform_5(%arg0: i32) -> (i32, i32, i32) {
    %c0_i32 = arith.constant 0 : i32
    %c0_i32_0 = arith.constant 0 : i32
    %c0_i32_1 = arith.constant 0 : i32
    return %arg0, %c0_i32, %c0_i32_0 : i32, i32, i32
  }
}

</mosaic_0001>

<llo_original>
// kernel: _lambda_.1
$region0: #{_lambda_.1}
  #allocation0 [shape = 'u32[]', space=smem, size = 0x4, offset = 0x4, fixed_abs, tag = 'smem constant byte address 0x4 - core index']
  #allocation1 [shape = 'u32[144,128]{1,0:T(1,128)}', space=vmem, size = 0x12000, scoped, tag = 'internal scratch']
  #allocation2 [shape = 'f32[5,5,32]{2,1,0:T(8,128)}', space=vmem, size = 0x5000, scoped, tag = 'scratch operand']
  #allocation3 [shape = 'f32[6,6,16]{2,1,0:T(8,128)}', space=vmem, size = 0x6000, scoped, tag = 'scratch operand']
  #allocation4 [shape = 'f32[8,8,64]{2,1,0:T(8,128)}', space=vmem, size = 0x8000, scoped, tag = 'scratch operand']
  #allocation5 [shape = 'f32[4,4,128]{2,1,0:T(4,128)}', space=vmem, size = 0x2000, scoped, tag = 'scratch operand']
  #allocation6 [shape = 'f32[4,4,144]{2,1,0:T(4,128)}', space=vmem, size = 0x4000, scoped, tag = 'scratch operand']
  %s0 = inlined_call_operand.vmem [shape: f32[2,9,9,16], index: 0, kind: input, shape index: {}]
  %s1 = inlined_call_operand.vmem [shape: f32[64,128], index: 1, kind: input, shape index: {}]
  %s2 = inlined_call_operand.vmem [shape: f32[128,128], index: 2, kind: input, shape index: {}]
  %s3 = inlined_call_operand.vmem [shape: f32[144,128], index: 3, kind: input, shape index: {}]
  %s4 = inlined_call_operand.vmem [shape: f32[3,128], index: 4, kind: input, shape index: {}]
  %s5 = inlined_call_operand.hbm [shape: f32[2,16,128], index: 5, kind: output, shape index: {}]
  %s6 = sld [smem:[#allocation0]]
  $region53: #{_lambda_.1} parent=0
    _
  %s8 = ssub.s32 1, %s6
  %s9 = scalar_select 0, %s8, %s6
  $region1: #{_lambda_.1} parent=0
    #allocation7 [shape = 'u8[16384]{0}', space=vmem, size = 0x4000, scoped, tag = 'output window, operand 0']
    #allocation8 [shape = 's32[2]{0}', space=sflag, size = 0x8, scoped, tag = 'scoped memory for _lambda_.1']
    %10 = vsyncpa [#allocation8], 0
    %s11 = scalar_lea.sflag [#allocation8], 1
    %12 = vsyncpa %s11, 0
    loop: start=0, step=1, limit=4
    $region2: #{_lambda_.1} parent=1 // loop_pre_header
      _
    $region3: #{_lambda_.1} parent=1 // loop_header
      %s14 = sphi 0, %s18
      %p15 = scmp.ge.s32.totalorder %s14, 4
      %s24 = sphi 0, %s26
      %s27 = sphi 0, %s24
      %s28 = sphi 0, %s27
      %s44 = sphi 0, %s28
      %s48 = sphi 0, %s48
      %s50 = sphi 0, %s48
      %s51 = sphi 0, %s50
      %s65 = sphi 0, %s51
      %s69 = sphi 0, %s69
      %s71 = sphi 0, %s69
      %s72 = sphi 0, %s71
      %s86 = sphi 0, %s72
      %s90 = sphi 0, %s90
      %s92 = sphi 0, %s90
      %s93 = sphi 0, %s92
      %s107 = sphi 0, %s93
      %s111 = sphi 0, %s111
      %s113 = sphi 0, %s111
      %s114 = sphi 0, %s113
      %s128 = sphi 0, %s114
      %s134 = sphi 0, %s136
      %s137 = sphi 0, %s134
      %s138 = sphi 0, %s137
      %s154 = sphi 0, %s138
    $region4: #{_lambda_.1} parent=1 // loop_header_branch
      %17 = sbr.rel (%p15) target = $region8
    $region5: #{_lambda_.1} parent=1 // loop_body
      %s19 = ssub.s32 %s14, 1
      %s20 = ssub.s32 %s14, 2
      %s21 = sadd.s32 %s14, 1
      %s22 = ssub.s32 %s14, %s21
      %p23 = scmp.eq.s32.totalorder %s22, 0
      %s25 = sadd.s32 %s24, 1
      %s26 = scalar_select %p23, %s24, %s25
      %p29 = pneg %p23
      %p30 = scmp.eq.s32.totalorder %s14, 1
      %p31 = por %p29, %p30
      %p32 = scmp.ne.s32.totalorder %s24, %s27
      %p33 = scmp.eq.s32.totalorder %s14, 0
      %p34 = por %p32, %p33
      %p35 = scmp.ne.s32.totalorder %s24, %s27
      %p36 = scmp.eq.s32.totalorder %s19, 1
      %p37 = por %p35, %p36
      %p38 = scmp.ne.s32.totalorder %s27, %s28
      %p39 = scmp.eq.s32.totalorder %s19, 0
      %p40 = por %p38, %p39
      %p41 = scmp.ne.s32.totalorder %s27, %s28
      %p42 = scmp.eq.s32.totalorder %s20, 1
      %p43 = por %p41, %p42
      %p45 = scmp.ne.s32.totalorder %s28, %s44
      %p46 = scmp.eq.s32.totalorder %s20, 0
      %p47 = por %p45, %p46
      %s49 = sadd.s32 %s48, 1
      %p52 = scmp.eq.s32.totalorder %s14, 1
      %p53 = scmp.ne.s32.totalorder %s48, %s50
      %p54 = scmp.eq.s32.totalorder %s14, 0
      %p55 = por %p53, %p54
      %p56 = scmp.ne.s32.totalorder %s48, %s50
      %p57 = scmp.eq.s32.totalorder %s19, 1
      %p58 = por %p56, %p57
      %p59 = scmp.ne.s32.totalorder %s50, %s51
      %p60 = scmp.eq.s32.totalorder %s19, 0
      %p61 = por %p59, %p60
      %p62 = scmp.ne.s32.totalorder %s50, %s51
      %p63 = scmp.eq.s32.totalorder %s20, 1
      %p64 = por %p62, %p63
      %p66 = scmp.ne.s32.totalorder %s51, %s65
      %p67 = scmp.eq.s32.totalorder %s20, 0
      %p68 = por %p66, %p67
      %s70 = sadd.s32 %s69, 1
      %p73 = scmp.eq.s32.totalorder %s14, 1
      %p74 = scmp.ne.s32.totalorder %s69, %s71
      %p75 = scmp.eq.s32.totalorder %s14, 0
      %p76 = por %p74, %p75
      %p77 = scmp.ne.s32.totalorder %s69, %s71
      %p78 = scmp.eq.s32.totalorder %s19, 1
      %p79 = por %p77, %p78
      %p80 = scmp.ne.s32.totalorder %s71, %s72
      %p81 = scmp.eq.s32.totalorder %s19, 0
      %p82 = por %p80, %p81
      %p83 = scmp.ne.s32.totalorder %s71, %s72
      %p84 = scmp.eq.s32.totalorder %s20, 1
      %p85 = por %p83, %p84
      %p87 = scmp.ne.s32.totalorder %s72, %s86
      %p88 = scmp.eq.s32.totalorder %s20, 0
      %p89 = por %p87, %p88
      %s91 = sadd.s32 %s90, 1
      %p94 = scmp.eq.s32.totalorder %s14, 1
      %p95 = scmp.ne.s32.totalorder %s90, %s92
      %p96 = scmp.eq.s32.totalorder %s14, 0
      %p97 = por %p95, %p96
      %p98 = scmp.ne.s32.totalorder %s90, %s92
      %p99 = scmp.eq.s32.totalorder %s19, 1
      %p100 = por %p98, %p99
      %p101 = scmp.ne.s32.totalorder %s92, %s93
      %p102 = scmp.eq.s32.totalorder %s19, 0
      %p103 = por %p101, %p102
      %p104 = scmp.ne.s32.totalorder %s92, %s93
      %p105 = scmp.eq.s32.totalorder %s20, 1
      %p106 = por %p104, %p105
      %p108 = scmp.ne.s32.totalorder %s93, %s107
      %p109 = scmp.eq.s32.totalorder %s20, 0
      %p110 = por %p108, %p109
      %s112 = sadd.s32 %s111, 1
      %p115 = scmp.eq.s32.totalorder %s14, 1
      %p116 = scmp.ne.s32.totalorder %s111, %s113
      %p117 = scmp.eq.s32.totalorder %s14, 0
      %p118 = por %p116, %p117
      %p119 = scmp.ne.s32.totalorder %s111, %s113
      %p120 = scmp.eq.s32.totalorder %s19, 1
      %p121 = por %p119, %p120
      %p122 = scmp.ne.s32.totalorder %s113, %s114
      %p123 = scmp.eq.s32.totalorder %s19, 0
      %p124 = por %p122, %p123
      %p125 = scmp.ne.s32.totalorder %s113, %s114
      %p126 = scmp.eq.s32.totalorder %s20, 1
      %p127 = por %p125, %p126
      %p129 = scmp.ne.s32.totalorder %s114, %s128
      %p130 = scmp.eq.s32.totalorder %s20, 0
      %p131 = por %p129, %p130
      %s132 = ssub.s32 %s14, %s21
      %p133 = scmp.eq.s32.totalorder %s132, 0
      %s135 = sadd.s32 %s134, 1
      %s136 = scalar_select %p133, %s134, %s135
      %p139 = pneg %p133
      %p140 = scmp.eq.s32.totalorder %s14, 1
      %p141 = por %p139, %p140
      %p142 = scmp.ne.s32.totalorder %s134, %s137
      %p143 = scmp.eq.s32.totalorder %s14, 0
      %p144 = por %p142, %p143
      %p145 = scmp.ne.s32.totalorder %s134, %s137
      %p146 = scmp.eq.s32.totalorder %s19, 1
      %p147 = por %p145, %p146
      %p148 = scmp.ne.s32.totalorder %s137, %s138
      %p149 = scmp.eq.s32.totalorder %s19, 0
      %p150 = por %p148, %p149
      %p151 = scmp.ne.s32.totalorder %s137, %s138
      %p152 = scmp.eq.s32.totalorder %s20, 1
      %p153 = por %p151, %p152
      %p155 = scmp.ne.s32.totalorder %s138, %s154
      %p156 = scmp.eq.s32.totalorder %s20, 0
      %p157 = por %p155, %p156
      %p158 = scmp.le.s32.totalorder 1, %s14
      %p159 = scmp.lt.s32.totalorder %s14, 3
      %p160 = pnand %p158, %p159
      %p161 = pneg %p160
      // Predicated region
      $region9: #{_lambda_.1} parent=5 // pred_check
        _
      $region10: #{_lambda_.1} parent=5 // pred_check_branch
        %163 = sbr.rel (%p160) target = $region12
      $region11: #{_lambda_.1} parent=5 // pred_region
        %s164 = ssub.s32 %s14, 1
        // Predicated region
        $region13: #{_lambda_.1} parent=11 // pred_check
          %p165 = pneg %p61
        $region14: #{_lambda_.1} parent=11 // pred_check_branch
          %167 = sbr.rel (%p165) target = $region16
        $region15: #{_lambda_.1} parent=11 // pred_region
          _
        $region16: #{_lambda_.1} parent=11 // pred_fallthru
          _
        // Predicated region
        $region17: #{_lambda_.1} parent=11 // pred_check
          %p168 = pneg %p82
        $region18: #{_lambda_.1} parent=11 // pred_check_branch
          %170 = sbr.rel (%p168) target = $region20
        $region19: #{_lambda_.1} parent=11 // pred_region
          _
        $region20: #{_lambda_.1} parent=11 // pred_fallthru
          _
        // Predicated region
        $region21: #{_lambda_.1} parent=11 // pred_check
          %p171 = pneg %p103
        $region22: #{_lambda_.1} parent=11 // pred_check_branch
          %173 = sbr.rel (%p171) target = $region24
        $region23: #{_lambda_.1} parent=11 // pred_region
          _
        $region24: #{_lambda_.1} parent=11 // pred_fallthru
          _
        // Predicated region
        $region25: #{_lambda_.1} parent=11 // pred_check
          %p174 = pneg %p124
        $region26: #{_lambda_.1} parent=11 // pred_check_branch
          %176 = sbr.rel (%p174) target = $region28
        $region27: #{_lambda_.1} parent=11 // pred_region
          _
        $region28: #{_lambda_.1} parent=11 // pred_fallthru
          _
      $region12: #{_lambda_.1} parent=5 // pred_fallthru
        _
      %p177 = scmp.lt.s32.totalorder %s14, 2
      // Predicated region
      $region29: #{_lambda_.1} parent=5 // pred_check
        %p178 = pneg %p177
      $region30: #{_lambda_.1} parent=5 // pred_check_branch
        %180 = sbr.rel (%p178) target = $region32
      $region31: #{_lambda_.1} parent=5 // pred_region
        // Predicated region
        $region33: #{_lambda_.1} parent=31 // pred_check
          %p181 = pneg %p34
        $region34: #{_lambda_.1} parent=31 // pred_check_branch
          %183 = sbr.rel (%p181) target = $region36
        $region35: #{_lambda_.1} parent=31 // pred_region
          %p184 = scmp.lt.s32.totalorder %s14, 1
          %s185 = scalar_select %p184, %s14, 1
          %s186 = smul.addr %s185, 18
          %s187 = smul.addr %s186, 8
          %s188 = scalar_lea.vmem %s0, %s187
        $region36: #{_lambda_.1} parent=31 // pred_fallthru
          _
      $region32: #{_lambda_.1} parent=5 // pred_fallthru
        _
      %p189 = scmp.le.s32.totalorder 1, %s14
      %p190 = scmp.lt.s32.totalorder %s14, 3
      %p191 = pnand %p189, %p190
      %p192 = pneg %p191
      // Predicated region
      $region37: #{_lambda_.1} parent=5 // pred_check
        _
      $region38: #{_lambda_.1} parent=5 // pred_check_branch
        %194 = sbr.rel (%p191) target = $region40
      $region39: #{_lambda_.1} parent=5 // pred_region
        %s195 = ssub.s32 %s14, 1
        %p196 = scmp.lt.s32.totalorder %s19, 1
        %s197 = scalar_select %p196, %s19, 1
        %s198 = smul.addr %s197, 18
        %s199 = smul.addr %s198, 8
        %s200 = scalar_lea.vmem %s0, %s199
        %p201 = pneg %p40
        %p202 = pneg %p37
        %p203 = pneg %p61
        %p204 = pneg %p58
        %p205 = pneg %p82
        %p206 = pneg %p79
        %p207 = pneg %p103
        %p208 = pneg %p100
        %p209 = pneg %p124
        %p210 = pneg %p121
        %p211 = pneg %p150
        %p212 = pneg %p147
        %s213 = sand.u32 %s137, 1
        %s214 = scalar_lea.sflag [#allocation8], %s213
        %s215 = sand.u32 %s137, 1
        %s216 = smul.addr %s215, 16
        %s217 = scalar_lea.vmem [#allocation7], %s216
        %p218 = scmp.lt.s32.totalorder %s19, 1
        %s219 = scalar_select %p218, %s19, 1
        %s220 = smul.addr %s219, 18
        %s221 = smul.addr %s220, 8
        %s222 = scalar_lea.vmem %s0, %s221
        %v223 = vld [vmem:[%s4] sm:$0x1]
        %v224 = vld [vmem:[%s222] sm:$0xff]
        %v225 = vld [vmem:[%s222 + $0x10] sm:$0xff]
        %v226 = vld [vmem:[%s222 + $0x20] sm:$0xff]
        %v227 = vld [vmem:[%s222 + $0x30] sm:$0xff]
        %v228 = vld [vmem:[%s222 + $0x40] sm:$0xff]
        %v229 = vld [vmem:[%s222 + $0x50] sm:$0xff]
        %v230 = vld [vmem:[%s222 + $0x60] sm:$0xff]
        %v231 = vld [vmem:[%s222 + $0x70] sm:$0xff]
        %vm232 = vcmask 130048
        %233 = vst.msk [vmem:[#allocation4] sm:$0xff] %vm232, %v224
        %234 = vst.msk [vmem:[#allocation4 + $0x8] sm:$0xff] %vm232, %v225
        %235 = vst.msk [vmem:[#allocation4 + $0x10] sm:$0xff] %vm232, %v226
        %236 = vst.msk [vmem:[#allocation4 + $0x18] sm:$0xff] %vm232, %v227
        %237 = vst.msk [vmem:[#allocation4 + $0x20] sm:$0xff] %vm232, %v228
        %238 = vst.msk [vmem:[#allocation4 + $0x28] sm:$0xff] %vm232, %v229
        %239 = vst.msk [vmem:[#allocation4 + $0x30] sm:$0xff] %vm232, %v230
        %240 = vst.msk [vmem:[#allocation4 + $0x38] sm:$0xff] %vm232, %v231
        %v241 = vld [vmem:[%s222 + $0x1] sm:$0xff]
        %v242 = vld [vmem:[%s222 + $0x11] sm:$0xff]
        %v243 = vld [vmem:[%s222 + $0x21] sm:$0xff]
        %v244 = vld [vmem:[%s222 + $0x31] sm:$0xff]
        %v245 = vld [vmem:[%s222 + $0x41] sm:$0xff]
        %v246 = vld [vmem:[%s222 + $0x51] sm:$0xff]
        %v247 = vld [vmem:[%s222 + $0x61] sm:$0xff]
        %v248 = vld [vmem:[%s222 + $0x71] sm:$0xff]
        %257 = vrot.lane.b32.xlu0 %v241, 16
        %v258 = vpop.permute.xlu0 %257
        %259 = vrot.lane.b32.xlu0 %v242, 16
        %v260 = vpop.permute.xlu0 %259
        %261 = vrot.lane.b32.xlu0 %v243, 16
        %v262 = vpop.permute.xlu0 %261
        %263 = vrot.lane.b32.xlu0 %v244, 16
        %v264 = vpop.permute.xlu0 %263
        %265 = vrot.lane.b32.xlu0 %v245, 16
        %v266 = vpop.permute.xlu0 %265
        %267 = vrot.lane.b32.xlu0 %v246, 16
        %v268 = vpop.permute.xlu0 %267
        %269 = vrot.lane.b32.xlu0 %v247, 16
        %v270 = vpop.permute.xlu0 %269
        %271 = vrot.lane.b32.xlu0 %v248, 16
        %v272 = vpop.permute.xlu0 %271
        %vm281 = vcmask 261248
        %282 = vst.msk [vmem:[#allocation4] sm:$0xff] %vm281, %v258
        %283 = vst.msk [vmem:[#allocation4 + $0x8] sm:$0xff] %vm281, %v260
        %284 = vst.msk [vmem:[#allocation4 + $0x10] sm:$0xff] %vm281, %v262
        %285 = vst.msk [vmem:[#allocation4 + $0x18] sm:$0xff] %vm281, %v264
        %286 = vst.msk [vmem:[#allocation4 + $0x20] sm:$0xff] %vm281, %v266
        %287 = vst.msk [vmem:[#allocation4 + $0x28] sm:$0xff] %vm281, %v268
        %288 = vst.msk [vmem:[#allocation4 + $0x30] sm:$0xff] %vm281, %v270
        %289 = vst.msk [vmem:[#allocation4 + $0x38] sm:$0xff] %vm281, %v272
        %s290 = scalar_lea.vmem %s222, 16
        %v291 = vld [vmem:[%s290] sm:$0xff]
        %v292 = vld [vmem:[%s290 + $0x10] sm:$0xff]
        %v293 = vld [vmem:[%s290 + $0x20] sm:$0xff]
        %v294 = vld [vmem:[%s290 + $0x30] sm:$0xff]
        %v295 = vld [vmem:[%s290 + $0x40] sm:$0xff]
        %v296 = vld [vmem:[%s290 + $0x50] sm:$0xff]
        %v297 = vld [vmem:[%s290 + $0x60] sm:$0xff]
        %v298 = vld [vmem:[%s290 + $0x70] sm:$0xff]
        %307 = vrot.lane.b32.xlu0 %v291, 32
        %v308 = vpop.permute.xlu0 %307
        %309 = vrot.lane.b32.xlu0 %v292, 32
        %v310 = vpop.permute.xlu0 %309
        %311 = vrot.lane.b32.xlu0 %v293, 32
        %v312 = vpop.permute.xlu0 %311
        %313 = vrot.lane.b32.xlu0 %v294, 32
        %v314 = vpop.permute.xlu0 %313
        %315 = vrot.lane.b32.xlu0 %v295, 32
        %v316 = vpop.permute.xlu0 %315
        %317 = vrot.lane.b32.xlu0 %v296, 32
        %v318 = vpop.permute.xlu0 %317
        %319 = vrot.lane.b32.xlu0 %v297, 32
        %v320 = vpop.permute.xlu0 %319
        %321 = vrot.lane.b32.xlu0 %v298, 32
        %v322 = vpop.permute.xlu0 %321
        %vm331 = vcmask 392448
        %332 = vst.msk [vmem:[#allocation4] sm:$0xff] %vm331, %v308
        %333 = vst.msk [vmem:[#allocation4 + $0x8] sm:$0xff] %vm331, %v310
        %334 = vst.msk [vmem:[#allocation4 + $0x10] sm:$0xff] %vm331, %v312
        %335 = vst.msk [vmem:[#allocation4 + $0x18] sm:$0xff] %vm331, %v314
        %336 = vst.msk [vmem:[#allocation4 + $0x20] sm:$0xff] %vm331, %v316
        %337 = vst.msk [vmem:[#allocation4 + $0x28] sm:$0xff] %vm331, %v318
        %338 = vst.msk [vmem:[#allocation4 + $0x30] sm:$0xff] %vm331, %v320
        %339 = vst.msk [vmem:[#allocation4 + $0x38] sm:$0xff] %vm331, %v322
        %v340 = vld [vmem:[%s290 + $0x1] sm:$0xff]
        %v341 = vld [vmem:[%s290 + $0x11] sm:$0xff]
        %v342 = vld [vmem:[%s290 + $0x21] sm:$0xff]
        %v343 = vld [vmem:[%s290 + $0x31] sm:$0xff]
        %v344 = vld [vmem:[%s290 + $0x41] sm:$0xff]
        %v345 = vld [vmem:[%s290 + $0x51] sm:$0xff]
        %v346 = vld [vmem:[%s290 + $0x61] sm:$0xff]
        %v347 = vld [vmem:[%s290 + $0x71] sm:$0xff]
        %356 = vrot.lane.b32.xlu0 %v340, 48
        %v357 = vpop.permute.xlu0 %356
        %358 = vrot.lane.b32.xlu0 %v341, 48
        %v359 = vpop.permute.xlu0 %358
        %360 = vrot.lane.b32.xlu0 %v342, 48
        %v361 = vpop.permute.xlu0 %360
        %362 = vrot.lane.b32.xlu0 %v343, 48
        %v363 = vpop.permute.xlu0 %362
        %364 = vrot.lane.b32.xlu0 %v344, 48
        %v365 = vpop.permute.xlu0 %364
        %366 = vrot.lane.b32.xlu0 %v345, 48
        %v367 = vpop.permute.xlu0 %366
        %368 = vrot.lane.b32.xlu0 %v346, 48
        %v369 = vpop.permute.xlu0 %368
        %370 = vrot.lane.b32.xlu0 %v347, 48
        %v371 = vpop.permute.xlu0 %370
        %vm380 = vcmask 523648
        %381 = vst.msk [vmem:[#allocation4] sm:$0xff] %vm380, %v357
        %382 = vst.msk [vmem:[#allocation4 + $0x8] sm:$0xff] %vm380, %v359
        %383 = vst.msk [vmem:[#allocation4 + $0x10] sm:$0xff] %vm380, %v361
        %384 = vst.msk [vmem:[#allocation4 + $0x18] sm:$0xff] %vm380, %v363
        %385 = vst.msk [vmem:[#allocation4 + $0x20] sm:$0xff] %vm380, %v365
        %386 = vst.msk [vmem:[#allocation4 + $0x28] sm:$0xff] %vm380, %v367
        %387 = vst.msk [vmem:[#allocation4 + $0x30] sm:$0xff] %vm380, %v369
        %388 = vst.msk [vmem:[#allocation4 + $0x38] sm:$0xff] %vm380, %v371
        %v389 = vld [vmem:[#allocation4] sm:$0xff]
        %v390 = vld [vmem:[#allocation4 + $0x8] sm:$0xff]
        %v391 = vld [vmem:[#allocation4 + $0x10] sm:$0xff]
        %v392 = vld [vmem:[#allocation4 + $0x18] sm:$0xff]
        %v393 = vld [vmem:[#allocation4 + $0x20] sm:$0xff]
        %v394 = vld [vmem:[#allocation4 + $0x28] sm:$0xff]
        %v395 = vld [vmem:[#allocation4 + $0x30] sm:$0xff]
        %v396 = vld [vmem:[#allocation4 + $0x38] sm:$0xff]
        %v397 = vld [vmem:[%s1] sm:$0xff]
        %v398 = vld [vmem:[%s1 + $0x8] sm:$0xff]
        %v399 = vld [vmem:[%s1 + $0x10] sm:$0xff]
        %v400 = vld [vmem:[%s1 + $0x18] sm:$0xff]
        %v401 = vld [vmem:[%s1 + $0x20] sm:$0xff]
        %v402 = vld [vmem:[%s1 + $0x28] sm:$0xff]
        %v403 = vld [vmem:[%s1 + $0x30] sm:$0xff]
        %v404 = vld [vmem:[%s1 + $0x38] sm:$0xff]
        %v405 = vlaneseq
        %v406 = vshrl.u32 %v405, 7
        %v407 = vsub.s32 0, %v406
        %v408 = vrot.slane %v223, %v407
        %vm409 = vcmask 523264
        %v411 = vsel %vm409, %v389, 0
        %v414 = vsel %vm409, %v390, 0
        %v417 = vsel %vm409, %v391, 0
        %v420 = vsel %vm409, %v392, 0
        %v423 = vsel %vm409, %v393, 0
        %v426 = vsel %vm409, %v394, 0
        %v429 = vsel %vm409, %v395, 0
        %v432 = vsel %vm409, %v396, 0
        %434 = vmatprep.subr.mxu0 0.0
        %435 = vmatpush1.msra.mxu0 %v397
        %436 = vmatprep.subr.mxu0 0.0
        %437 = vmatpush1.msra.mxu0 %v398
        %438 = vmatprep.subr.mxu0 0.0
        %439 = vmatpush1.msra.mxu0 %v399
        %440 = vmatprep.subr.mxu0 0.0
        %441 = vmatpush1.msra.mxu0 %v400
        %442 = vmatprep.subr.mxu0 0.0
        %443 = vmatpush1.msra.mxu0 %v401
        %444 = vmatprep.subr.mxu0 0.0
        %445 = vmatpush1.msra.mxu0 %v402
        %446 = vmatprep.subr.mxu0 0.0
        %447 = vmatpush1.msra.mxu0 %v403
        %448 = vmatprep.subr.mxu0 0.0
        %449 = vmatpush1.msra.mxu0 %v404
        %450 = vmatprep.subr.mxu0 0.0
        %451 = vmatpush1.msra.mxu0 0.0
        %452 = vmatprep.subr.mxu0 0.0
        %453 = vmatpush1.msra.mxu0 0.0
        %454 = vmatprep.subr.mxu0 0.0
        %455 = vmatpush1.msra.mxu0 0.0
        %456 = vmatprep.subr.mxu0 0.0
        %457 = vmatpush1.msra.mxu0 0.0
        %458 = vmatprep.subr.mxu0 0.0
        %459 = vmatpush1.msra.mxu0 0.0
        %460 = vmatprep.subr.mxu0 0.0
        %461 = vmatpush1.msra.mxu0 0.0
        %462 = vmatprep.subr.mxu0 0.0
        %463 = vmatpush1.msra.mxu0 0.0
        %464 = vmatprep.subr.mxu0 0.0
        %465 = vmatpush1.msra.mxu0 0.0
        %466 = vmatprep.subr.mxu0 0.0
        %467 = vmatpush1.msra.mxu0 0.0
        %468 = vmatprep.subr.mxu0 0.0
        %469 = vmatpush1.msra.mxu0 0.0
        %470 = vmatprep.subr.mxu0 0.0
        %471 = vmatpush1.msra.mxu0 0.0
        %472 = vmatprep.subr.mxu0 0.0
        %473 = vmatpush1.msra.mxu0 0.0
        %474 = vmatprep.subr.mxu0 0.0
        %475 = vmatpush1.msra.mxu0 0.0
        %476 = vmatprep.subr.mxu0 0.0
        %477 = vmatpush1.msra.mxu0 0.0
        %478 = vmatprep.subr.mxu0 0.0
        %479 = vmatpush1.msra.mxu0 0.0
        %480 = vmatprep.subr.mxu0 0.0
        %481 = vmatpush1.msra.mxu0 0.0
        %482 = vmatprep.subr.mxu0 0.0
        %483 = vmatpush1.msra.mxu0 0.0
        %484 = vmatprep.subr.mxu0 0.0
        %485 = vmatpush1.msra.mxu0 0.0
        %486 = vmatprep.subr.mxu0 0.0
        %487 = vmatpush1.msra.mxu0 0.0
        %488 = vmatprep.subr.mxu0 0.0
        %489 = vmatpush1.msra.mxu0 0.0
        %490 = vmatprep.subr.mxu0 0.0
        %491 = vmatpush1.msra.mxu0 0.0
        %492 = vmatprep.subr.mxu0 0.0
        %493 = vmatpush1.msra.mxu0 0.0
        %494 = vmatprep.subr.mxu0 0.0
        %495 = vmatpush1.msra.mxu0 0.0
        %496 = vmatprep.subr.mxu0 0.0
        %497 = vmatpush1.msra.mxu0 0.0
        %498 = vmatprep.mubr.f32.mxu0 0.0
        %499 = vmatmul.mubr.f32.gmra.mrb[0].mxu0 %v411
        %v500 = vpop.f32.mrb[0].mxu0
        %v501 = vadd.f32 %v408, %v500
        %v502 = vpop.f32.mrb[0].mxu0
        %503 = vmatprep.mubr.f32.mxu0 0.0
        %504 = vmatmul.mubr.f32.gmra.mrb[0].mxu0 %v414
        %v505 = vpop.f32.mrb[0].mxu0
        %v506 = vadd.f32 %v408, %v505
        %v507 = vpop.f32.mrb[0].mxu0
        %508 = vmatprep.mubr.f32.mxu0 0.0
        %509 = vmatmul.mubr.f32.gmra.mrb[0].mxu0 %v417
        %v510 = vpop.f32.mrb[0].mxu0
        %v511 = vadd.f32 %v408, %v510
        %v512 = vpop.f32.mrb[0].mxu0
        %513 = vmatprep.mubr.f32.mxu0 0.0
        %514 = vmatmul.mubr.f32.gmra.mrb[0].mxu0 %v420
        %v515 = vpop.f32.mrb[0].mxu0
        %v516 = vadd.f32 %v408, %v515
        %v517 = vpop.f32.mrb[0].mxu0
        %518 = vmatprep.mubr.f32.mxu0 0.0
        %519 = vmatmul.mubr.f32.gmra.mrb[0].mxu0 %v423
        %v520 = vpop.f32.mrb[0].mxu0
        %v521 = vadd.f32 %v408, %v520
        %v522 = vpop.f32.mrb[0].mxu0
        %523 = vmatprep.mubr.f32.mxu0 0.0
        %524 = vmatmul.mubr.f32.gmra.mrb[0].mxu0 %v426
        %v525 = vpop.f32.mrb[0].mxu0
        %v526 = vadd.f32 %v408, %v525
        %v527 = vpop.f32.mrb[0].mxu0
        %528 = vmatprep.mubr.f32.mxu0 0.0
        %529 = vmatmul.mubr.f32.gmra.mrb[0].mxu0 %v429
        %v530 = vpop.f32.mrb[0].mxu0
        %v531 = vadd.f32 %v408, %v530
        %v532 = vpop.f32.mrb[0].mxu0
        %533 = vmatprep.mubr.f32.mxu0 0.0
        %534 = vmatmul.mubr.f32.gmra.mrb[0].mxu0 %v432
        %v535 = vpop.f32.mrb[0].mxu0
        %v536 = vadd.f32 %v408, %v535
        %v537 = vpop.f32.mrb[0].mxu0
        %538 = vdwg.mxu0
        %v539 = vmax.f32 %v501, 0.0
        %v540 = vmax.f32 %v506, 0.0
        %v541 = vmax.f32 %v511, 0.0
        %v542 = vmax.f32 %v516, 0.0
        %v543 = vmax.f32 %v521, 0.0
        %v544 = vmax.f32 %v526, 0.0
        %v545 = vmax.f32 %v531, 0.0
        %v546 = vmax.f32 %v536, 0.0
        %s547 = scalar_lea.vmem [#allocation2], 32
        %vm548 = vcmask 126976
        %549 = vst.msk [vmem:[%s547] sm:$0x1f] %vm548, 0.0
        %vm550 = vcmask 258176
        %551 = vst.msk [vmem:[%s547] sm:$0x1f] %vm550, 0.0
        %vm552 = vcmask 57344
        %553 = vst.msk [vmem:[#allocation2 + $0x4] sm:$0x1] %vm552, 0.0
        %554 = vst.msk [vmem:[#allocation2 + $0xc] sm:$0x1] %vm552, 0.0
        %555 = vst.msk [vmem:[#allocation2 + $0x14] sm:$0x1] %vm552, 0.0
        %556 = vst.msk [vmem:[#allocation2 + $0x1c] sm:$0x1] %vm552, 0.0
        %557 = vst.msk [vmem:[#allocation2 + $0x24] sm:$0x1] %vm552, 0.0
        %vm558 = vcmask 188544
        %559 = vst.msk [vmem:[#allocation2 + $0x4] sm:$0x1] %vm558, 0.0
        %560 = vst.msk [vmem:[#allocation2 + $0xc] sm:$0x1] %vm558, 0.0
        %561 = vst.msk [vmem:[#allocation2 + $0x14] sm:$0x1] %vm558, 0.0
        %562 = vst.msk [vmem:[#allocation2 + $0x1c] sm:$0x1] %vm558, 0.0
        %563 = vst.msk [vmem:[#allocation2 + $0x24] sm:$0x1] %vm558, 0.0
        %vm564 = vcmask 122944
        %565 = vst.msk [vmem:[#allocation2 + $0x4] sm:$0x1] %vm564, 0.0
        %566 = vst.msk [vmem:[#allocation2 + $0xc] sm:$0x1] %vm564, 0.0
        %567 = vst.msk [vmem:[#allocation2 + $0x14] sm:$0x1] %vm564, 0.0
        %568 = vst.msk [vmem:[#allocation2 + $0x1c] sm:$0x1] %vm564, 0.0
        %569 = vst.msk [vmem:[#allocation2 + $0x24] sm:$0x1] %vm564, 0.0
        %vm570 = vcmask 254144
        %571 = vst.msk [vmem:[#allocation2 + $0x4] sm:$0x1] %vm570, 0.0
        %572 = vst.msk [vmem:[#allocation2 + $0xc] sm:$0x1] %vm570, 0.0
        %573 = vst.msk [vmem:[#allocation2 + $0x14] sm:$0x1] %vm570, 0.0
        %574 = vst.msk [vmem:[#allocation2 + $0x1c] sm:$0x1] %vm570, 0.0
        %575 = vst.msk [vmem:[#allocation2 + $0x24] sm:$0x1] %vm570, 0.0
        %v584 = vcombine.high %v539, %v539
        %v586 = vunpack.c.l.s4 1983009808
        %v587 = vunpack.c.0.s8 %v586
        %v588 = vlaneseq
        %v589 = vshrl.u32 %v588, 7
        %v590 = vsub.s32 %v587, %v589
        %v591 = vrot.slane %v539, %v590
        %v593 = vunpack.c.l.s4 1983009808
        %v594 = vunpack.c.0.s8 %v593
        %v595 = vlaneseq
        %v596 = vshrl.u32 %v595, 7
        %v597 = vsub.s32 %v594, %v596
        %v598 = vrot.slane %v584, %v597
        %v599 = vcombine.high %v591, %v591
        %v600 = vcombine.high %v598, %v598
        %v601 = vcombine.high %v540, %v540
        %v603 = vunpack.c.l.s4 1983009808
        %v604 = vunpack.c.0.s8 %v603
        %v605 = vlaneseq
        %v606 = vshrl.u32 %v605, 7
        %v607 = vsub.s32 %v604, %v606
        %v608 = vrot.slane %v540, %v607
        %v610 = vunpack.c.l.s4 1983009808
        %v611 = vunpack.c.0.s8 %v610
        %v612 = vlaneseq
        %v613 = vshrl.u32 %v612, 7
        %v614 = vsub.s32 %v611, %v613
        %v615 = vrot.slane %v601, %v614
        %v616 = vcombine.high %v608, %v608
        %v617 = vcombine.high %v615, %v615
        %v618 = vcombine.high %v541, %v541
        %v620 = vunpack.c.l.s4 1983009808
        %v621 = vunpack.c.0.s8 %v620
        %v622 = vlaneseq
        %v623 = vshrl.u32 %v622, 7
        %v624 = vsub.s32 %v621, %v623
        %v625 = vrot.slane %v541, %v624
        %v627 = vunpack.c.l.s4 1983009808
        %v628 = vunpack.c.0.s8 %v627
        %v629 = vlaneseq
        %v630 = vshrl.u32 %v629, 7
        %v631 = vsub.s32 %v628, %v630
        %v632 = vrot.slane %v618, %v631
        %v633 = vcombine.high %v625, %v625
        %v634 = vcombine.high %v632, %v632
        %v635 = vcombine.high %v542, %v542
        %v637 = vunpack.c.l.s4 1983009808
        %v638 = vunpack.c.0.s8 %v637
        %v639 = vlaneseq
        %v640 = vshrl.u32 %v639, 7
        %v641 = vsub.s32 %v638, %v640
        %v642 = vrot.slane %v542, %v641
        %v644 = vunpack.c.l.s4 1983009808
        %v645 = vunpack.c.0.s8 %v644
        %v646 = vlaneseq
        %v647 = vshrl.u32 %v646, 7
        %v648 = vsub.s32 %v645, %v647
        %v649 = vrot.slane %v635, %v648
        %v650 = vcombine.high %v642, %v642
        %v651 = vcombine.high %v649, %v649
        %v652 = vcombine.high %v543, %v543
        %v654 = vunpack.c.l.s4 1983009808
        %v655 = vunpack.c.0.s8 %v654
        %v656 = vlaneseq
        %v657 = vshrl.u32 %v656, 7
        %v658 = vsub.s32 %v655, %v657
        %v659 = vrot.slane %v543, %v658
        %v661 = vunpack.c.l.s4 1983009808
        %v662 = vunpack.c.0.s8 %v661
        %v663 = vlaneseq
        %v664 = vshrl.u32 %v663, 7
        %v665 = vsub.s32 %v662, %v664
        %v666 = vrot.slane %v652, %v665
        %v667 = vcombine.high %v659, %v659
        %v668 = vcombine.high %v666, %v666
        %v669 = vcombine.high %v544, %v544
        %v671 = vunpack.c.l.s4 1983009808
        %v672 = vunpack.c.0.s8 %v671
        %v673 = vlaneseq
        %v674 = vshrl.u32 %v673, 7
        %v675 = vsub.s32 %v672, %v674
        %v676 = vrot.slane %v544, %v675
        %v678 = vunpack.c.l.s4 1983009808
        %v679 = vunpack.c.0.s8 %v678
        %v680 = vlaneseq
        %v681 = vshrl.u32 %v680, 7
        %v682 = vsub.s32 %v679, %v681
        %v683 = vrot.slane %v669, %v682
        %v684 = vcombine.high %v676, %v676
        %v685 = vcombine.high %v683, %v683
        %v686 = vcombine.high %v545, %v545
        %v688 = vunpack.c.l.s4 1983009808
        %v689 = vunpack.c.0.s8 %v688
        %v690 = vlaneseq
        %v691 = vshrl.u32 %v690, 7
        %v692 = vsub.s32 %v689, %v691
        %v693 = vrot.slane %v545, %v692
        %v695 = vunpack.c.l.s4 1983009808
        %v696 = vunpack.c.0.s8 %v695
        %v697 = vlaneseq
        %v698 = vshrl.u32 %v697, 7
        %v699 = vsub.s32 %v696, %v698
        %v700 = vrot.slane %v686, %v699
        %v701 = vcombine.high %v693, %v693
        %v702 = vcombine.high %v700, %v700
        %v703 = vcombine.high %v546, %v546
        %v705 = vunpack.c.l.s4 1983009808
        %v706 = vunpack.c.0.s8 %v705
        %v707 = vlaneseq
        %v708 = vshrl.u32 %v707, 7
        %v709 = vsub.s32 %v706, %v708
        %v710 = vrot.slane %v546, %v709
        %v712 = vunpack.c.l.s4 1983009808
        %v713 = vunpack.c.0.s8 %v712
        %v714 = vlaneseq
        %v715 = vshrl.u32 %v714, 7
        %v716 = vsub.s32 %v713, %v715
        %v717 = vrot.slane %v703, %v716
        %v718 = vcombine.high %v710, %v710
        %v719 = vcombine.high %v717, %v717
        %v720 = vlaneseq
        %v721 = vshrl.u32 %v720, 7
        %v722 = vsub.s32 0, %v721
        %v723 = vrot.slane %v591, %v722
        %v724 = vlaneseq
        %v725 = vshrl.u32 %v724, 7
        %v726 = vsub.s32 0, %v725
        %v727 = vrot.slane %v599, %v726
        %v728 = vlaneseq
        %v729 = vshrl.u32 %v728, 7
        %v730 = vsub.s32 0, %v729
        %v731 = vrot.slane %v598, %v730
        %v732 = vlaneseq
        %v733 = vshrl.u32 %v732, 7
        %v734 = vsub.s32 0, %v733
        %v735 = vrot.slane %v600, %v734
        %v736 = vlaneseq
        %v737 = vshrl.u32 %v736, 7
        %v738 = vsub.s32 0, %v737
        %v739 = vrot.slane %v625, %v738
        %v740 = vlaneseq
        %v741 = vshrl.u32 %v740, 7
        %v742 = vsub.s32 0, %v741
        %v743 = vrot.slane %v633, %v742
        %v744 = vlaneseq
        %v745 = vshrl.u32 %v744, 7
        %v746 = vsub.s32 0, %v745
        %v747 = vrot.slane %v632, %v746
        %v748 = vlaneseq
        %v749 = vshrl.u32 %v748, 7
        %v750 = vsub.s32 0, %v749
        %v751 = vrot.slane %v634, %v750
        %v752 = vlaneseq
        %v753 = vshrl.u32 %v752, 7
        %v754 = vsub.s32 0, %v753
        %v755 = vrot.slane %v659, %v754
        %v756 = vlaneseq
        %v757 = vshrl.u32 %v756, 7
        %v758 = vsub.s32 0, %v757
        %v759 = vrot.slane %v667, %v758
        %v760 = vlaneseq
        %v761 = vshrl.u32 %v760, 7
        %v762 = vsub.s32 0, %v761
        %v763 = vrot.slane %v666, %v762
        %v764 = vlaneseq
        %v765 = vshrl.u32 %v764, 7
        %v766 = vsub.s32 0, %v765
        %v767 = vrot.slane %v668, %v766
        %v768 = vlaneseq
        %v769 = vshrl.u32 %v768, 7
        %v770 = vsub.s32 0, %v769
        %v771 = vrot.slane %v693, %v770
        %v772 = vlaneseq
        %v773 = vshrl.u32 %v772, 7
        %v774 = vsub.s32 0, %v773
        %v775 = vrot.slane %v701, %v774
        %v776 = vlaneseq
        %v777 = vshrl.u32 %v776, 7
        %v778 = vsub.s32 0, %v777
        %v779 = vrot.slane %v700, %v778
        %v780 = vlaneseq
        %v781 = vshrl.u32 %v780, 7
        %v782 = vsub.s32 0, %v781
        %v783 = vrot.slane %v702, %v782
        %vm784 = vcmask 1041409
        %v785 = vsel %vm784, %v727, %v723
        %vm786 = vcmask 1042434
        %v787 = vsel %vm786, %v731, %v785
        %vm788 = vcmask 1043459
        %v789 = vsel %vm788, %v735, %v787
        %v790 = vsel %vm784, %v743, %v739
        %v791 = vsel %vm786, %v747, %v790
        %v792 = vsel %vm788, %v751, %v791
        %v793 = vsel %vm784, %v759, %v755
        %v794 = vsel %vm786, %v763, %v793
        %v795 = vsel %vm788, %v767, %v794
        %v796 = vsel %vm784, %v775, %v771
        %v797 = vsel %vm786, %v779, %v796
        %v798 = vsel %vm788, %v783, %v797
        %vm803 = vcmask 60416
        %804 = vst.msk [vmem:[#allocation2] sm:$0xf] %vm803, %v789
        %805 = vst.msk [vmem:[#allocation2 + $0x8] sm:$0xf] %vm803, %v792
        %806 = vst.msk [vmem:[#allocation2 + $0x10] sm:$0xf] %vm803, %v795
        %807 = vst.msk [vmem:[#allocation2 + $0x18] sm:$0xf] %vm803, %v798
        %v808 = vlaneseq
        %v809 = vshrl.u32 %v808, 7
        %v810 = vsub.s32 1, %v809
        %v811 = vrot.slane %v591, %v810
        %v812 = vlaneseq
        %v813 = vshrl.u32 %v812, 7
        %v814 = vsub.s32 1, %v813
        %v815 = vrot.slane %v599, %v814
        %v816 = vlaneseq
        %v817 = vshrl.u32 %v816, 7
        %v818 = vsub.s32 1, %v817
        %v819 = vrot.slane %v598, %v818
        %v820 = vlaneseq
        %v821 = vshrl.u32 %v820, 7
        %v822 = vsub.s32 1, %v821
        %v823 = vrot.slane %v600, %v822
        %v824 = vlaneseq
        %v825 = vshrl.u32 %v824, 7
        %v826 = vsub.s32 1, %v825
        %v827 = vrot.slane %v625, %v826
        %v828 = vlaneseq
        %v829 = vshrl.u32 %v828, 7
        %v830 = vsub.s32 1, %v829
        %v831 = vrot.slane %v633, %v830
        %v832 = vlaneseq
        %v833 = vshrl.u32 %v832, 7
        %v834 = vsub.s32 1, %v833
        %v835 = vrot.slane %v632, %v834
        %v836 = vlaneseq
        %v837 = vshrl.u32 %v836, 7
        %v838 = vsub.s32 1, %v837
        %v839 = vrot.slane %v634, %v838
        %v840 = vlaneseq
        %v841 = vshrl.u32 %v840, 7
        %v842 = vsub.s32 1, %v841
        %v843 = vrot.slane %v659, %v842
        %v844 = vlaneseq
        %v845 = vshrl.u32 %v844, 7
        %v846 = vsub.s32 1, %v845
        %v847 = vrot.slane %v667, %v846
        %v848 = vlaneseq
        %v849 = vshrl.u32 %v848, 7
        %v850 = vsub.s32 1, %v849
        %v851 = vrot.slane %v666, %v850
        %v852 = vlaneseq
        %v853 = vshrl.u32 %v852, 7
        %v854 = vsub.s32 1, %v853
        %v855 = vrot.slane %v668, %v854
        %v856 = vlaneseq
        %v857 = vshrl.u32 %v856, 7
        %v858 = vsub.s32 1, %v857
        %v859 = vrot.slane %v693, %v858
        %v860 = vlaneseq
        %v861 = vshrl.u32 %v860, 7
        %v862 = vsub.s32 1, %v861
        %v863 = vrot.slane %v701, %v862
        %v864 = vlaneseq
        %v865 = vshrl.u32 %v864, 7
        %v866 = vsub.s32 1, %v865
        %v867 = vrot.slane %v700, %v866
        %v868 = vlaneseq
        %v869 = vshrl.u32 %v868, 7
        %v870 = vsub.s32 1, %v869
        %v871 = vrot.slane %v702, %v870
        %v872 = vsel %vm786, %v815, %v811
        %v873 = vsel %vm788, %v819, %v872
        %vm874 = vcmask 1044484
        %v875 = vsel %vm874, %v823, %v873
        %v876 = vsel %vm786, %v831, %v827
        %v877 = vsel %vm788, %v835, %v876
        %v878 = vsel %vm874, %v839, %v877
        %v879 = vsel %vm786, %v847, %v843
        %v880 = vsel %vm788, %v851, %v879
        %v881 = vsel %vm874, %v855, %v880
        %v882 = vsel %vm786, %v863, %v859
        %v883 = vsel %vm788, %v867, %v882
        %v884 = vsel %vm874, %v871, %v883
        %885 = vrot.lane.b32.xlu0 %v875, 8
        %v886 = vpop.permute.xlu0 %885
        %887 = vrot.lane.b32.xlu0 %v878, 8
        %v888 = vpop.permute.xlu0 %887
        %889 = vrot.lane.b32.xlu0 %v881, 8
        %v890 = vpop.permute.xlu0 %889
        %891 = vrot.lane.b32.xlu0 %v884, 8
        %v892 = vpop.permute.xlu0 %891
        %vm897 = vcmask 127041
        %898 = vst.msk [vmem:[#allocation2 - $0x1] sm:$0x1e] %vm897, %v886
        %899 = vst.msk [vmem:[#allocation2 + $0x7] sm:$0x1e] %vm897, %v888
        %900 = vst.msk [vmem:[#allocation2 + $0xf] sm:$0x1e] %vm897, %v890
        %901 = vst.msk [vmem:[#allocation2 + $0x17] sm:$0x1e] %vm897, %v892
        %v902 = vlaneseq
        %v903 = vshrl.u32 %v902, 7
        %v904 = vsub.s32 0, %v903
        %v905 = vrot.slane %v608, %v904
        %v906 = vlaneseq
        %v907 = vshrl.u32 %v906, 7
        %v908 = vsub.s32 0, %v907
        %v909 = vrot.slane %v616, %v908
        %v910 = vlaneseq
        %v911 = vshrl.u32 %v910, 7
        %v912 = vsub.s32 0, %v911
        %v913 = vrot.slane %v615, %v912
        %v914 = vlaneseq
        %v915 = vshrl.u32 %v914, 7
        %v916 = vsub.s32 0, %v915
        %v917 = vrot.slane %v617, %v916
        %v918 = vlaneseq
        %v919 = vshrl.u32 %v918, 7
        %v920 = vsub.s32 0, %v919
        %v921 = vrot.slane %v642, %v920
        %v922 = vlaneseq
        %v923 = vshrl.u32 %v922, 7
        %v924 = vsub.s32 0, %v923
        %v925 = vrot.slane %v650, %v924
        %v926 = vlaneseq
        %v927 = vshrl.u32 %v926, 7
        %v928 = vsub.s32 0, %v927
        %v929 = vrot.slane %v649, %v928
        %v930 = vlaneseq
        %v931 = vshrl.u32 %v930, 7
        %v932 = vsub.s32 0, %v931
        %v933 = vrot.slane %v651, %v932
        %v934 = vlaneseq
        %v935 = vshrl.u32 %v934, 7
        %v936 = vsub.s32 0, %v935
        %v937 = vrot.slane %v676, %v936
        %v938 = vlaneseq
        %v939 = vshrl.u32 %v938, 7
        %v940 = vsub.s32 0, %v939
        %v941 = vrot.slane %v684, %v940
        %v942 = vlaneseq
        %v943 = vshrl.u32 %v942, 7
        %v944 = vsub.s32 0, %v943
        %v945 = vrot.slane %v683, %v944
        %v946 = vlaneseq
        %v947 = vshrl.u32 %v946, 7
        %v948 = vsub.s32 0, %v947
        %v949 = vrot.slane %v685, %v948
        %v950 = vlaneseq
        %v951 = vshrl.u32 %v950, 7
        %v952 = vsub.s32 0, %v951
        %v953 = vrot.slane %v710, %v952
        %v954 = vlaneseq
        %v955 = vshrl.u32 %v954, 7
        %v956 = vsub.s32 0, %v955
        %v957 = vrot.slane %v718, %v956
        %v958 = vlaneseq
        %v959 = vshrl.u32 %v958, 7
        %v960 = vsub.s32 0, %v959
        %v961 = vrot.slane %v717, %v960
        %v962 = vlaneseq
        %v963 = vshrl.u32 %v962, 7
        %v964 = vsub.s32 0, %v963
        %v965 = vrot.slane %v719, %v964
        %v966 = vsel %vm784, %v909, %v905
        %v967 = vsel %vm786, %v913, %v966
        %v968 = vsel %vm788, %v917, %v967
        %v969 = vsel %vm784, %v925, %v921
        %v970 = vsel %vm786, %v929, %v969
        %v971 = vsel %vm788, %v933, %v970
        %v972 = vsel %vm784, %v941, %v937
        %v973 = vsel %vm786, %v945, %v972
        %v974 = vsel %vm788, %v949, %v973
        %v975 = vsel %vm784, %v957, %v953
        %v976 = vsel %vm786, %v961, %v975
        %v977 = vsel %vm788, %v965, %v976
        %978 = vrot.lane.b32.xlu0 %v968, 16
        %v979 = vpop.permute.xlu0 %978
        %980 = vrot.lane.b32.xlu0 %v971, 16
        %v981 = vpop.permute.xlu0 %980
        %982 = vrot.lane.b32.xlu0 %v974, 16
        %v983 = vpop.permute.xlu0 %982
        %984 = vrot.lane.b32.xlu0 %v977, 16
        %v985 = vpop.permute.xlu0 %984
        %vm990 = vcmask 191616
        %991 = vst.msk [vmem:[#allocation2] sm:$0xf] %vm990, %v979
        %992 = vst.msk [vmem:[#allocation2 + $0x8] sm:$0xf] %vm990, %v981
        %993 = vst.msk [vmem:[#allocation2 + $0x10] sm:$0xf] %vm990, %v983
        %994 = vst.msk [vmem:[#allocation2 + $0x18] sm:$0xf] %vm990, %v985
        %v995 = vlaneseq
        %v996 = vshrl.u32 %v995, 7
        %v997 = vsub.s32 1, %v996
        %v998 = vrot.slane %v608, %v997
        %v999 = vlaneseq
        %v1000 = vshrl.u32 %v999, 7
        %v1001 = vsub.s32 1, %v1000
        %v1002 = vrot.slane %v616, %v1001
        %v1003 = vlaneseq
        %v1004 = vshrl.u32 %v1003, 7
        %v1005 = vsub.s32 1, %v1004
        %v1006 = vrot.slane %v615, %v1005
        %v1007 = vlaneseq
        %v1008 = vshrl.u32 %v1007, 7
        %v1009 = vsub.s32 1, %v1008
        %v1010 = vrot.slane %v617, %v1009
        %v1011 = vlaneseq
        %v1012 = vshrl.u32 %v1011, 7
        %v1013 = vsub.s32 1, %v1012
        %v1014 = vrot.slane %v642, %v1013
        %v1015 = vlaneseq
        %v1016 = vshrl.u32 %v1015, 7
        %v1017 = vsub.s32 1, %v1016
        %v1018 = vrot.slane %v650, %v1017
        %v1019 = vlaneseq
        %v1020 = vshrl.u32 %v1019, 7
        %v1021 = vsub.s32 1, %v1020
        %v1022 = vrot.slane %v649, %v1021
        %v1023 = vlaneseq
        %v1024 = vshrl.u32 %v1023, 7
        %v1025 = vsub.s32 1, %v1024
        %v1026 = vrot.slane %v651, %v1025
        %v1027 = vlaneseq
        %v1028 = vshrl.u32 %v1027, 7
        %v1029 = vsub.s32 1, %v1028
        %v1030 = vrot.slane %v676, %v1029
        %v1031 = vlaneseq
        %v1032 = vshrl.u32 %v1031, 7
        %v1033 = vsub.s32 1, %v1032
        %v1034 = vrot.slane %v684, %v1033
        %v1035 = vlaneseq
        %v1036 = vshrl.u32 %v1035, 7
        %v1037 = vsub.s32 1, %v1036
        %v1038 = vrot.slane %v683, %v1037
        %v1039 = vlaneseq
        %v1040 = vshrl.u32 %v1039, 7
        %v1041 = vsub.s32 1, %v1040
        %v1042 = vrot.slane %v685, %v1041
        %v1043 = vlaneseq
        %v1044 = vshrl.u32 %v1043, 7
        %v1045 = vsub.s32 1, %v1044
        %v1046 = vrot.slane %v710, %v1045
        %v1047 = vlaneseq
        %v1048 = vshrl.u32 %v1047, 7
        %v1049 = vsub.s32 1, %v1048
        %v1050 = vrot.slane %v718, %v1049
        %v1051 = vlaneseq
        %v1052 = vshrl.u32 %v1051, 7
        %v1053 = vsub.s32 1, %v1052
        %v1054 = vrot.slane %v717, %v1053
        %v1055 = vlaneseq
        %v1056 = vshrl.u32 %v1055, 7
        %v1057 = vsub.s32 1, %v1056
        %v1058 = vrot.slane %v719, %v1057
        %v1059 = vsel %vm786, %v1002, %v998
        %v1060 = vsel %vm788, %v1006, %v1059
        %v1061 = vsel %vm874, %v1010, %v1060
        %v1062 = vsel %vm786, %v1018, %v1014
        %v1063 = vsel %vm788, %v1022, %v1062
        %v1064 = vsel %vm874, %v1026, %v1063
        %v1065 = vsel %vm786, %v1034, %v1030
        %v1066 = vsel %vm788, %v1038, %v1065
        %v1067 = vsel %vm874, %v1042, %v1066
        %v1068 = vsel %vm786, %v1050, %v1046
        %v1069 = vsel %vm788, %v1054, %v1068
        %v1070 = vsel %vm874, %v1058, %v1069
        %1071 = vrot.lane.b32.xlu0 %v1061, 24
        %v1072 = vpop.permute.xlu0 %1071
        %1073 = vrot.lane.b32.xlu0 %v1064, 24
        %v1074 = vpop.permute.xlu0 %1073
        %1075 = vrot.lane.b32.xlu0 %v1067, 24
        %v1076 = vpop.permute.xlu0 %1075
        %1077 = vrot.lane.b32.xlu0 %v1070, 24
        %v1078 = vpop.permute.xlu0 %1077
        %vm1083 = vcmask 258241
        %1084 = vst.msk [vmem:[#allocation2 - $0x1] sm:$0x1e] %vm1083, %v1072
        %1085 = vst.msk [vmem:[#allocation2 + $0x7] sm:$0x1e] %vm1083, %v1074
        %1086 = vst.msk [vmem:[#allocation2 + $0xf] sm:$0x1e] %vm1083, %v1076
        %1087 = vst.msk [vmem:[#allocation2 + $0x17] sm:$0x1e] %vm1083, %v1078
        %v1088 = vld [vmem:[%s4 + $0x1] sm:$0x1]
        %v1089 = vld [vmem:[#allocation2] sm:$0xf]
        %v1090 = vld [vmem:[#allocation2 + $0x8] sm:$0xf]
        %v1091 = vld [vmem:[#allocation2 + $0x10] sm:$0xf]
        %v1092 = vld [vmem:[#allocation2 + $0x18] sm:$0xf]
        %vm1093 = vcmask 257024
        %1094 = vst.msk [vmem:[#allocation5] sm:$0xf] %vm1093, %v1089
        %1095 = vst.msk [vmem:[#allocation5 + $0x4] sm:$0xf] %vm1093, %v1090
        %1096 = vst.msk [vmem:[#allocation5 + $0x8] sm:$0xf] %vm1093, %v1091
        %1097 = vst.msk [vmem:[#allocation5 + $0xc] sm:$0xf] %vm1093, %v1092
        %v1098 = vld [vmem:[#allocation2 + $0x1] sm:$0xf]
        %v1099 = vld [vmem:[#allocation2 + $0x9] sm:$0xf]
        %v1100 = vld [vmem:[#allocation2 + $0x11] sm:$0xf]
        %v1101 = vld [vmem:[#allocation2 + $0x19] sm:$0xf]
        %1106 = vrot.lane.b32.xlu0 %v1098, 32
        %v1107 = vpop.permute.xlu0 %1106
        %1108 = vrot.lane.b32.xlu0 %v1099, 32
        %v1109 = vpop.permute.xlu0 %1108
        %1110 = vrot.lane.b32.xlu0 %v1100, 32
        %v1111 = vpop.permute.xlu0 %1110
        %1112 = vrot.lane.b32.xlu0 %v1101, 32
        %v1113 = vpop.permute.xlu0 %1112
        %vm1118 = vcmask 519424
        %1119 = vst.msk [vmem:[#allocation5] sm:$0xf] %vm1118, %v1107
        %1120 = vst.msk [vmem:[#allocation5 + $0x4] sm:$0xf] %vm1118, %v1109
        %1121 = vst.msk [vmem:[#allocation5 + $0x8] sm:$0xf] %vm1118, %v1111
        %1122 = vst.msk [vmem:[#allocation5 + $0xc] sm:$0xf] %vm1118, %v1113
        %s1123 = scalar_lea.vmem [#allocation2], 8
        %v1124 = vld [vmem:[%s1123] sm:$0xf]
        %v1125 = vld [vmem:[%s1123 + $0x8] sm:$0xf]
        %v1126 = vld [vmem:[%s1123 + $0x10] sm:$0xf]
        %v1127 = vld [vmem:[%s1123 + $0x18] sm:$0xf]
        %1132 = vrot.lane.b32.xlu0 %v1124, 64
        %v1133 = vpop.permute.xlu0 %1132
        %1134 = vrot.lane.b32.xlu0 %v1125, 64
        %v1135 = vpop.permute.xlu0 %1134
        %1136 = vrot.lane.b32.xlu0 %v1126, 64
        %v1137 = vpop.permute.xlu0 %1136
        %1138 = vrot.lane.b32.xlu0 %v1127, 64
        %v1139 = vpop.permute.xlu0 %1138
        %vm1144 = vcmask 781824
        %1145 = vst.msk [vmem:[#allocation5] sm:$0xf] %vm1144, %v1133
        %1146 = vst.msk [vmem:[#allocation5 + $0x4] sm:$0xf] %vm1144, %v1135
        %1147 = vst.msk [vmem:[#allocation5 + $0x8] sm:$0xf] %vm1144, %v1137
        %1148 = vst.msk [vmem:[#allocation5 + $0xc] sm:$0xf] %vm1144, %v1139
        %v1149 = vld [vmem:[%s1123 + $0x1] sm:$0xf]
        %v1150 = vld [vmem:[%s1123 + $0x9] sm:$0xf]
        %v1151 = vld [vmem:[%s1123 + $0x11] sm:$0xf]
        %v1152 = vld [vmem:[%s1123 + $0x19] sm:$0xf]
        %1157 = vrot.lane.b32.xlu0 %v1149, 96
        %v1158 = vpop.permute.xlu0 %1157
        %1159 = vrot.lane.b32.xlu0 %v1150, 96
        %v1160 = vpop.permute.xlu0 %1159
        %1161 = vrot.lane.b32.xlu0 %v1151, 96
        %v1162 = vpop.permute.xlu0 %1161
        %1163 = vrot.lane.b32.xlu0 %v1152, 96
        %v1164 = vpop.permute.xlu0 %1163
        %vm1169 = vcmask 1044224
        %1170 = vst.msk [vmem:[#allocation5] sm:$0xf] %vm1169, %v1158
        %1171 = vst.msk [vmem:[#allocation5 + $0x4] sm:$0xf] %vm1169, %v1160
        %1172 = vst.msk [vmem:[#allocation5 + $0x8] sm:$0xf] %vm1169, %v1162
        %1173 = vst.msk [vmem:[#allocation5 + $0xc] sm:$0xf] %vm1169, %v1164
        %v1174 = vld [vmem:[#allocation5] sm:$0xf]
        %v1175 = vld [vmem:[#allocation5 + $0x4] sm:$0xf]
        %v1176 = vld [vmem:[#allocation5 + $0x8] sm:$0xf]
        %v1177 = vld [vmem:[#allocation5 + $0xc] sm:$0xf]
        %v1178 = vld [vmem:[%s2] sm:$0xff]
        %v1179 = vld [vmem:[%s2 + $0x8] sm:$0xff]
        %v1180 = vld [vmem:[%s2 + $0x10] sm:$0xff]
        %v1181 = vld [vmem:[%s2 + $0x18] sm:$0xff]
        %v1182 = vld [vmem:[%s2 + $0x20] sm:$0xff]
        %v1183 = vld [vmem:[%s2 + $0x28] sm:$0xff]
        %v1184 = vld [vmem:[%s2 + $0x30] sm:$0xff]
        %v1185 = vld [vmem:[%s2 + $0x38] sm:$0xff]
        %v1186 = vld [vmem:[%s2 + $0x40] sm:$0xff]
        %v1187 = vld [vmem:[%s2 + $0x48] sm:$0xff]
        %v1188 = vld [vmem:[%s2 + $0x50] sm:$0xff]
        %v1189 = vld [vmem:[%s2 + $0x58] sm:$0xff]
        %v1190 = vld [vmem:[%s2 + $0x60] sm:$0xff]
        %v1191 = vld [vmem:[%s2 + $0x68] sm:$0xff]
        %v1192 = vld [vmem:[%s2 + $0x70] sm:$0xff]
        %v1193 = vld [vmem:[%s2 + $0x78] sm:$0xff]
        %v1194 = vlaneseq
        %v1195 = vshrl.u32 %v1194, 7
        %v1196 = vsub.s32 0, %v1195
        %v1197 = vrot.slane %v1088, %v1196
        %v1202 = vcombine.low %v1174, %v1175
        %v1203 = vcombine.low %v1176, %v1177
        %1206 = vmatprep.subr.mxu0 0.0
        %1207 = vmatpush1.msra.mxu0 %v1178
        %1208 = vmatprep.subr.mxu0 0.0
        %1209 = vmatpush1.msra.mxu0 %v1179
        %1210 = vmatprep.subr.mxu0 0.0
        %1211 = vmatpush1.msra.mxu0 %v1180
        %1212 = vmatprep.subr.mxu0 0.0
        %1213 = vmatpush1.msra.mxu0 %v1181
        %1214 = vmatprep.subr.mxu0 0.0
        %1215 = vmatpush1.msra.mxu0 %v1182
        %1216 = vmatprep.subr.mxu0 0.0
        %1217 = vmatpush1.msra.mxu0 %v1183
        %1218 = vmatprep.subr.mxu0 0.0
        %1219 = vmatpush1.msra.mxu0 %v1184
        %1220 = vmatprep.subr.mxu0 0.0
        %1221 = vmatpush1.msra.mxu0 %v1185
        %1222 = vmatprep.subr.mxu0 0.0
        %1223 = vmatpush1.msra.mxu0 %v1186
        %1224 = vmatprep.subr.mxu0 0.0
        %1225 = vmatpush1.msra.mxu0 %v1187
        %1226 = vmatprep.subr.mxu0 0.0
        %1227 = vmatpush1.msra.mxu0 %v1188
        %1228 = vmatprep.subr.mxu0 0.0
        %1229 = vmatpush1.msra.mxu0 %v1189
        %1230 = vmatprep.subr.mxu0 0.0
        %1231 = vmatpush1.msra.mxu0 %v1190
        %1232 = vmatprep.subr.mxu0 0.0
        %1233 = vmatpush1.msra.mxu0 %v1191
        %1234 = vmatprep.subr.mxu0 0.0
        %1235 = vmatpush1.msra.mxu0 %v1192
        %1236 = vmatprep.subr.mxu0 0.0
        %1237 = vmatpush1.msra.mxu0 %v1193
        %1238 = vmatprep.subr.mxu0 0.0
        %1239 = vmatpush1.msra.mxu0 0.0
        %1240 = vmatprep.subr.mxu0 0.0
        %1241 = vmatpush1.msra.mxu0 0.0
        %1242 = vmatprep.subr.mxu0 0.0
        %1243 = vmatpush1.msra.mxu0 0.0
        %1244 = vmatprep.subr.mxu0 0.0
        %1245 = vmatpush1.msra.mxu0 0.0
        %1246 = vmatprep.subr.mxu0 0.0
        %1247 = vmatpush1.msra.mxu0 0.0
        %1248 = vmatprep.subr.mxu0 0.0
        %1249 = vmatpush1.msra.mxu0 0.0
        %1250 = vmatprep.subr.mxu0 0.0
        %1251 = vmatpush1.msra.mxu0 0.0
        %1252 = vmatprep.subr.mxu0 0.0
        %1253 = vmatpush1.msra.mxu0 0.0
        %1254 = vmatprep.subr.mxu0 0.0
        %1255 = vmatpush1.msra.mxu0 0.0
        %1256 = vmatprep.subr.mxu0 0.0
        %1257 = vmatpush1.msra.mxu0 0.0
        %1258 = vmatprep.subr.mxu0 0.0
        %1259 = vmatpush1.msra.mxu0 0.0
        %1260 = vmatprep.subr.mxu0 0.0
        %1261 = vmatpush1.msra.mxu0 0.0
        %1262 = vmatprep.subr.mxu0 0.0
        %1263 = vmatpush1.msra.mxu0 0.0
        %1264 = vmatprep.subr.mxu0 0.0
        %1265 = vmatpush1.msra.mxu0 0.0
        %1266 = vmatprep.subr.mxu0 0.0
        %1267 = vmatpush1.msra.mxu0 0.0
        %1268 = vmatprep.subr.mxu0 0.0
        %1269 = vmatpush1.msra.mxu0 0.0
        %1270 = vmatprep.mubr.f32.mxu0 0.0
        %1271 = vmatmul.mubr.f32.gmra.mrb[0].mxu0 %v1202
        %v1272 = vpop.f32.mrb[0].mxu0
        %v1273 = vadd.f32 %v1197, %v1272
        %v1274 = vpop.f32.mrb[0].mxu0
        %1275 = vmatprep.mubr.f32.mxu0 0.0
        %1276 = vmatmul.mubr.f32.gmra.mrb[0].mxu0 %v1203
        %v1277 = vpop.f32.mrb[0].mxu0
        %v1278 = vadd.f32 %v1197, %v1277
        %v1279 = vpop.f32.mrb[0].mxu0
        %1280 = vdwg.mxu0
        %v1281 = vmax.f32 %v1273, 0.0
        %v1282 = vmax.f32 %v1278, 0.0
        %vm1283 = vcmask 128000
        %1284 = vst.msk [vmem:[#allocation3] sm:$0x3f] %vm1283, 0.0
        %s1285 = scalar_lea.vmem [#allocation3], 40
        %1286 = vst.msk [vmem:[%s1285] sm:$0x3f] %vm1283, 0.0
        %vm1287 = vcmask 122880
        %1288 = vst.msk [vmem:[#allocation3] sm:$0x1] %vm1287, 0.0
        %1289 = vst.msk [vmem:[#allocation3 + $0x8] sm:$0x1] %vm1287, 0.0
        %1290 = vst.msk [vmem:[#allocation3 + $0x10] sm:$0x1] %vm1287, 0.0
        %1291 = vst.msk [vmem:[#allocation3 + $0x18] sm:$0x1] %vm1287, 0.0
        %1292 = vst.msk [vmem:[#allocation3 + $0x20] sm:$0x1] %vm1287, 0.0
        %1293 = vst.msk [vmem:[#allocation3 + $0x28] sm:$0x1] %vm1287, 0.0
        %1294 = vst.msk [vmem:[#allocation3 + $0x5] sm:$0x1] %vm1287, 0.0
        %1295 = vst.msk [vmem:[#allocation3 + $0xd] sm:$0x1] %vm1287, 0.0
        %1296 = vst.msk [vmem:[#allocation3 + $0x15] sm:$0x1] %vm1287, 0.0
        %1297 = vst.msk [vmem:[#allocation3 + $0x1d] sm:$0x1] %vm1287, 0.0
        %1298 = vst.msk [vmem:[#allocation3 + $0x25] sm:$0x1] %vm1287, 0.0
        %1299 = vst.msk [vmem:[#allocation3 + $0x2d] sm:$0x1] %vm1287, 0.0
        %v1302 = vcombine.high %v1281, %v1281
        %v1303 = vcombine.high %v1282, %v1282
        %s1306 = scalar_lea.vmem [#allocation3], 8
        %vm1307 = vcmask 125952
        %1308 = vst.msk [vmem:[%s1306 + $0x1] sm:$0xf] %vm1307, %v1281
        %1309 = vst.msk [vmem:[%s1306 + $0x9] sm:$0xf] %vm1307, %v1302
        %1310 = vst.msk [vmem:[%s1306 + $0x11] sm:$0xf] %vm1307, %v1282
        %1311 = vst.msk [vmem:[%s1306 + $0x19] sm:$0xf] %vm1307, %v1303
        %v1312 = vld [vmem:[%s4 + $0x2] sm:$0x1]
        %v1313 = vld [vmem:[#allocation3] sm:$0xf]
        %v1314 = vld [vmem:[#allocation3 + $0x8] sm:$0xf]
        %v1315 = vld [vmem:[#allocation3 + $0x10] sm:$0xf]
        %v1316 = vld [vmem:[#allocation3 + $0x18] sm:$0xf]
        %1317 = vst.msk [vmem:[#allocation6] sm:$0xf] %vm1307, %v1313
        %1318 = vst.msk [vmem:[#allocation6 + $0x8] sm:$0xf] %vm1307, %v1314
        %1319 = vst.msk [vmem:[#allocation6 + $0x10] sm:$0xf] %vm1307, %v1315
        %1320 = vst.msk [vmem:[#allocation6 + $0x18] sm:$0xf] %vm1307, %v1316
        %v1321 = vld [vmem:[#allocation3 + $0x1] sm:$0xf]
        %v1322 = vld [vmem:[#allocation3 + $0x9] sm:$0xf]
        %v1323 = vld [vmem:[#allocation3 + $0x11] sm:$0xf]
        %v1324 = vld [vmem:[#allocation3 + $0x19] sm:$0xf]
        %1329 = vrot.lane.b32.xlu0 %v1321, 16
        %v1330 = vpop.permute.xlu0 %1329
        %1331 = vrot.lane.b32.xlu0 %v1322, 16
        %v1332 = vpop.permute.xlu0 %1331
        %1333 = vrot.lane.b32.xlu0 %v1323, 16
        %v1334 = vpop.permute.xlu0 %1333
        %1335 = vrot.lane.b32.xlu0 %v1324, 16
        %v1336 = vpop.permute.xlu0 %1335
        %vm1341 = vcmask 257152
        %1342 = vst.msk [vmem:[#allocation6] sm:$0xf] %vm1341, %v1330
        %1343 = vst.msk [vmem:[#allocation6 + $0x8] sm:$0xf] %vm1341, %v1332
        %1344 = vst.msk [vmem:[#allocation6 + $0x10] sm:$0xf] %vm1341, %v1334
        %1345 = vst.msk [vmem:[#allocation6 + $0x18] sm:$0xf] %vm1341, %v1336
        %v1346 = vld [vmem:[#allocation3 + $0x2] sm:$0xf]
        %v1347 = vld [vmem:[#allocation3 + $0xa] sm:$0xf]
        %v1348 = vld [vmem:[#allocation3 + $0x12] sm:$0xf]
        %v1349 = vld [vmem:[#allocation3 + $0x1a] sm:$0xf]
        %1354 = vrot.lane.b32.xlu0 %v1346, 32
        %v1355 = vpop.permute.xlu0 %1354
        %1356 = vrot.lane.b32.xlu0 %v1347, 32
        %v1357 = vpop.permute.xlu0 %1356
        %1358 = vrot.lane.b32.xlu0 %v1348, 32
        %v1359 = vpop.permute.xlu0 %1358
        %1360 = vrot.lane.b32.xlu0 %v1349, 32
        %v1361 = vpop.permute.xlu0 %1360
        %vm1366 = vcmask 388352
        %1367 = vst.msk [vmem:[#allocation6] sm:$0xf] %vm1366, %v1355
        %1368 = vst.msk [vmem:[#allocation6 + $0x8] sm:$0xf] %vm1366, %v1357
        %1369 = vst.msk [vmem:[#allocation6 + $0x10] sm:$0xf] %vm1366, %v1359
        %1370 = vst.msk [vmem:[#allocation6 + $0x18] sm:$0xf] %vm1366, %v1361
        %v1371 = vld [vmem:[%s1306] sm:$0xf]
        %v1372 = vld [vmem:[%s1306 + $0x8] sm:$0xf]
        %v1373 = vld [vmem:[%s1306 + $0x10] sm:$0xf]
        %v1374 = vld [vmem:[%s1306 + $0x18] sm:$0xf]
        %1379 = vrot.lane.b32.xlu0 %v1371, 48
        %v1380 = vpop.permute.xlu0 %1379
        %1381 = vrot.lane.b32.xlu0 %v1372, 48
        %v1382 = vpop.permute.xlu0 %1381
        %1383 = vrot.lane.b32.xlu0 %v1373, 48
        %v1384 = vpop.permute.xlu0 %1383
        %1385 = vrot.lane.b32.xlu0 %v1374, 48
        %v1386 = vpop.permute.xlu0 %1385
        %vm1391 = vcmask 519552
        %1392 = vst.msk [vmem:[#allocation6] sm:$0xf] %vm1391, %v1380
        %1393 = vst.msk [vmem:[#allocation6 + $0x8] sm:$0xf] %vm1391, %v1382
        %1394 = vst.msk [vmem:[#allocation6 + $0x10] sm:$0xf] %vm1391, %v1384
        %1395 = vst.msk [vmem:[#allocation6 + $0x18] sm:$0xf] %vm1391, %v1386
        %v1396 = vld [vmem:[%s1306 + $0x1] sm:$0xf]
        %v1397 = vld [vmem:[%s1306 + $0x9] sm:$0xf]
        %v1398 = vld [vmem:[%s1306 + $0x11] sm:$0xf]
        %v1399 = vld [vmem:[%s1306 + $0x19] sm:$0xf]
        %1404 = vrot.lane.b32.xlu0 %v1396, 64
        %v1405 = vpop.permute.xlu0 %1404
        %1406 = vrot.lane.b32.xlu0 %v1397, 64
        %v1407 = vpop.permute.xlu0 %1406
        %1408 = vrot.lane.b32.xlu0 %v1398, 64
        %v1409 = vpop.permute.xlu0 %1408
        %1410 = vrot.lane.b32.xlu0 %v1399, 64
        %v1411 = vpop.permute.xlu0 %1410
        %vm1416 = vcmask 650752
        %1417 = vst.msk [vmem:[#allocation6] sm:$0xf] %vm1416, %v1405
        %1418 = vst.msk [vmem:[#allocation6 + $0x8] sm:$0xf] %vm1416, %v1407
        %1419 = vst.msk [vmem:[#allocation6 + $0x10] sm:$0xf] %vm1416, %v1409
        %1420 = vst.msk [vmem:[#allocation6 + $0x18] sm:$0xf] %vm1416, %v1411
        %v1421 = vld [vmem:[%s1306 + $0x2] sm:$0xf]
        %v1422 = vld [vmem:[%s1306 + $0xa] sm:$0xf]
        %v1423 = vld [vmem:[%s1306 + $0x12] sm:$0xf]
        %v1424 = vld [vmem:[%s1306 + $0x1a] sm:$0xf]
        %1429 = vrot.lane.b32.xlu0 %v1421, 80
        %v1430 = vpop.permute.xlu0 %1429
        %1431 = vrot.lane.b32.xlu0 %v1422, 80
        %v1432 = vpop.permute.xlu0 %1431
        %1433 = vrot.lane.b32.xlu0 %v1423, 80
        %v1434 = vpop.permute.xlu0 %1433
        %1435 = vrot.lane.b32.xlu0 %v1424, 80
        %v1436 = vpop.permute.xlu0 %1435
        %vm1441 = vcmask 781952
        %1442 = vst.msk [vmem:[#allocation6] sm:$0xf] %vm1441, %v1430
        %1443 = vst.msk [vmem:[#allocation6 + $0x8] sm:$0xf] %vm1441, %v1432
        %1444 = vst.msk [vmem:[#allocation6 + $0x10] sm:$0xf] %vm1441, %v1434
        %1445 = vst.msk [vmem:[#allocation6 + $0x18] sm:$0xf] %vm1441, %v1436
        %s1446 = scalar_lea.vmem [#allocation3], 16
        %v1447 = vld [vmem:[%s1446] sm:$0xf]
        %v1448 = vld [vmem:[%s1446 + $0x8] sm:$0xf]
        %v1449 = vld [vmem:[%s1446 + $0x10] sm:$0xf]
        %v1450 = vld [vmem:[%s1446 + $0x18] sm:$0xf]
        %1455 = vrot.lane.b32.xlu0 %v1447, 96
        %v1456 = vpop.permute.xlu0 %1455
        %1457 = vrot.lane.b32.xlu0 %v1448, 96
        %v1458 = vpop.permute.xlu0 %1457
        %1459 = vrot.lane.b32.xlu0 %v1449, 96
        %v1460 = vpop.permute.xlu0 %1459
        %1461 = vrot.lane.b32.xlu0 %v1450, 96
        %v1462 = vpop.permute.xlu0 %1461
        %vm1467 = vcmask 913152
        %1468 = vst.msk [vmem:[#allocation6] sm:$0xf] %vm1467, %v1456
        %1469 = vst.msk [vmem:[#allocation6 + $0x8] sm:$0xf] %vm1467, %v1458
        %1470 = vst.msk [vmem:[#allocation6 + $0x10] sm:$0xf] %vm1467, %v1460
        %1471 = vst.msk [vmem:[#allocation6 + $0x18] sm:$0xf] %vm1467, %v1462
        %v1472 = vld [vmem:[%s1446 + $0x1] sm:$0xf]
        %v1473 = vld [vmem:[%s1446 + $0x9] sm:$0xf]
        %v1474 = vld [vmem:[%s1446 + $0x11] sm:$0xf]
        %v1475 = vld [vmem:[%s1446 + $0x19] sm:$0xf]
        %1480 = vrot.lane.b32.xlu0 %v1472, 112
        %v1481 = vpop.permute.xlu0 %1480
        %1482 = vrot.lane.b32.xlu0 %v1473, 112
        %v1483 = vpop.permute.xlu0 %1482
        %1484 = vrot.lane.b32.xlu0 %v1474, 112
        %v1485 = vpop.permute.xlu0 %1484
        %1486 = vrot.lane.b32.xlu0 %v1475, 112
        %v1487 = vpop.permute.xlu0 %1486
        %vm1492 = vcmask 1044352
        %1493 = vst.msk [vmem:[#allocation6] sm:$0xf] %vm1492, %v1481
        %1494 = vst.msk [vmem:[#allocation6 + $0x8] sm:$0xf] %vm1492, %v1483
        %1495 = vst.msk [vmem:[#allocation6 + $0x10] sm:$0xf] %vm1492, %v1485
        %1496 = vst.msk [vmem:[#allocation6 + $0x18] sm:$0xf] %vm1492, %v1487
        %v1497 = vld [vmem:[%s1446 + $0x2] sm:$0xf]
        %v1498 = vld [vmem:[%s1446 + $0xa] sm:$0xf]
        %v1499 = vld [vmem:[%s1446 + $0x12] sm:$0xf]
        %v1500 = vld [vmem:[%s1446 + $0x1a] sm:$0xf]
        %1501 = vst.msk [vmem:[#allocation6 + $0x4] sm:$0xf] %vm1307, %v1497
        %1502 = vst.msk [vmem:[#allocation6 + $0xc] sm:$0xf] %vm1307, %v1498
        %1503 = vst.msk [vmem:[#allocation6 + $0x14] sm:$0xf] %vm1307, %v1499
        %1504 = vst.msk [vmem:[#allocation6 + $0x1c] sm:$0xf] %vm1307, %v1500
        %v1505 = vld [vmem:[#allocation6] sm:$0xff]
        %v1506 = vld [vmem:[#allocation6 + $0x8] sm:$0xff]
        %v1507 = vld [vmem:[#allocation6 + $0x10] sm:$0xff]
        %v1508 = vld [vmem:[#allocation6 + $0x18] sm:$0xff]
        %v1509 = vld [vmem:[%s3] sm:$0xff]
        %v1510 = vld [vmem:[%s3 + $0x8] sm:$0xff]
        %v1511 = vld [vmem:[%s3 + $0x10] sm:$0xff]
        %v1512 = vld [vmem:[%s3 + $0x18] sm:$0xff]
        %v1513 = vld [vmem:[%s3 + $0x20] sm:$0xff]
        %v1514 = vld [vmem:[%s3 + $0x28] sm:$0xff]
        %v1515 = vld [vmem:[%s3 + $0x30] sm:$0xff]
        %v1516 = vld [vmem:[%s3 + $0x38] sm:$0xff]
        %v1517 = vld [vmem:[%s3 + $0x40] sm:$0xff]
        %v1518 = vld [vmem:[%s3 + $0x48] sm:$0xff]
        %v1519 = vld [vmem:[%s3 + $0x50] sm:$0xff]
        %v1520 = vld [vmem:[%s3 + $0x58] sm:$0xff]
        %v1521 = vld [vmem:[%s3 + $0x60] sm:$0xff]
        %v1522 = vld [vmem:[%s3 + $0x68] sm:$0xff]
        %v1523 = vld [vmem:[%s3 + $0x70] sm:$0xff]
        %v1524 = vld [vmem:[%s3 + $0x78] sm:$0xff]
        %v1525 = vld [vmem:[%s3 + $0x80] sm:$0xff]
        %v1526 = vld [vmem:[%s3 + $0x88] sm:$0xff]
        %v1527 = vlaneseq
        %v1528 = vshrl.u32 %v1527, 7
        %v1529 = vsub.s32 0, %v1528
        %v1530 = vrot.slane %v1312, %v1529
        %v1535 = vcombine.low %v1505, %v1506
        %v1536 = vcombine.high %v1505, %v1506
        %v1537 = vcombine.low %v1507, %v1508
        %v1538 = vcombine.high %v1507, %v1508
        %v1541 = vsel %vm232, %v1536, 0
        %v1543 = vsel %vm232, %v1538, 0
        %1545 = vmatprep.subr.mxu0 0.0
        %1546 = vmatpush1.msra.mxu0 %v1509
        %1547 = vmatprep.subr.mxu0 0.0
        %1548 = vmatpush1.msra.mxu0 %v1510
        %1549 = vmatprep.subr.mxu0 0.0
        %1550 = vmatpush1.msra.mxu0 %v1511
        %1551 = vmatprep.subr.mxu0 0.0
        %1552 = vmatpush1.msra.mxu0 %v1512
        %1553 = vmatprep.subr.mxu0 0.0
        %1554 = vmatpush1.msra.mxu0 %v1513
        %1555 = vmatprep.subr.mxu0 0.0
        %1556 = vmatpush1.msra.mxu0 %v1514
        %1557 = vmatprep.subr.mxu0 0.0
        %1558 = vmatpush1.msra.mxu0 %v1515
        %1559 = vmatprep.subr.mxu0 0.0
        %1560 = vmatpush1.msra.mxu0 %v1516
        %1561 = vmatprep.subr.mxu0 0.0
        %1562 = vmatpush1.msra.mxu0 %v1517
        %1563 = vmatprep.subr.mxu0 0.0
        %1564 = vmatpush1.msra.mxu0 %v1518
        %1565 = vmatprep.subr.mxu0 0.0
        %1566 = vmatpush1.msra.mxu0 %v1519
        %1567 = vmatprep.subr.mxu0 0.0
        %1568 = vmatpush1.msra.mxu0 %v1520
        %1569 = vmatprep.subr.mxu0 0.0
        %1570 = vmatpush1.msra.mxu0 %v1521
        %1571 = vmatprep.subr.mxu0 0.0
        %1572 = vmatpush1.msra.mxu0 %v1522
        %1573 = vmatprep.subr.mxu0 0.0
        %1574 = vmatpush1.msra.mxu0 %v1523
        %1575 = vmatprep.subr.mxu0 0.0
        %1576 = vmatpush1.msra.mxu0 %v1524
        %1577 = vmatprep.subr.mxu0 0.0
        %1578 = vmatpush1.msra.mxu0 %v1525
        %1579 = vmatprep.subr.mxu0 0.0
        %1580 = vmatpush1.msra.mxu0 %v1526
        %1581 = vmatprep.subr.mxu0 0.0
        %1582 = vmatpush1.msra.mxu0 0.0
        %1583 = vmatprep.subr.mxu0 0.0
        %1584 = vmatpush1.msra.mxu0 0.0
        %1585 = vmatprep.subr.mxu0 0.0
        %1586 = vmatpush1.msra.mxu0 0.0
        %1587 = vmatprep.subr.mxu0 0.0
        %1588 = vmatpush1.msra.mxu0 0.0
        %1589 = vmatprep.subr.mxu0 0.0
        %1590 = vmatpush1.msra.mxu0 0.0
        %1591 = vmatprep.subr.mxu0 0.0
        %1592 = vmatpush1.msra.mxu0 0.0
        %1593 = vmatprep.subr.mxu0 0.0
        %1594 = vmatpush1.msra.mxu0 0.0
        %1595 = vmatprep.subr.mxu0 0.0
        %1596 = vmatpush1.msra.mxu0 0.0
        %1597 = vmatprep.subr.mxu0 0.0
        %1598 = vmatpush1.msra.mxu0 0.0
        %1599 = vmatprep.subr.mxu0 0.0
        %1600 = vmatpush1.msra.mxu0 0.0
        %1601 = vmatprep.subr.mxu0 0.0
        %1602 = vmatpush1.msra.mxu0 0.0
        %1603 = vmatprep.subr.mxu0 0.0
        %1604 = vmatpush1.msra.mxu0 0.0
        %1605 = vmatprep.subr.mxu0 0.0
        %1606 = vmatpush1.msra.mxu0 0.0
        %1607 = vmatprep.subr.mxu0 0.0
        %1608 = vmatpush1.msra.mxu0 0.0
        %1609 = vmatprep.mubr.f32.mxu0 %v1541
        %1610 = vmatmul.mubr.f32.gmra.mrb[0].mxu0 %v1535
        %v1611 = vpop.f32.mrb[0].mxu0
        %v1612 = vadd.f32 %v1530, %v1611
        %v1613 = vpop.f32.mrb[0].mxu0
        %1614 = vmatprep.mubr.f32.mxu0 %v1543
        %1615 = vmatmul.mubr.f32.gmra.mrb[0].mxu0 %v1537
        %v1616 = vpop.f32.mrb[0].mxu0
        %v1617 = vadd.f32 %v1530, %v1616
        %v1618 = vpop.f32.mrb[0].mxu0
        %1619 = vdwg.mxu0
        %v1620 = vmax.f32 %v1612, 0.0
        %v1621 = vmax.f32 %v1617, 0.0
        %1622 = vst [vmem:[%s217] sm:$0xff] %v1620
        %1623 = vst [vmem:[%s217 + $0x8] sm:$0xff] %v1621
        %s1624 = sand.u32 %s137, 1
        %s1625 = scalar_lea.sflag [#allocation8], %s1624
        %s1626 = sand.u32 %s137, 1
        %s1627 = smul.addr %s1626, 16
        %s1628 = scalar_lea.vmem [#allocation7], %s1627
        // Predicated region
        $region41: #{_lambda_.1} parent=39 // pred_check
          %p1629 = pneg %p147
        $region42: #{_lambda_.1} parent=39 // pred_check_branch
          %1631 = sbr.rel (%p1629) target = $region44
        $region43: #{_lambda_.1} parent=39 // pred_region
          %s1633 = ssub.s32 256, 256
          %1634 = vsyncadd %s1625, %s1633
          %s1635 = smul.addr %s19, 2
          %s1636 = smul.addr %s1635, 128
          %s1637 = scalar_lea.hbm %s5, %s1636
          %s1638 = sshll.u32 %s1628, 4
          %s1639 = int_to_ptr.vmem [resolvable:$true] %s1638
          %1644 = dma.vmem_to_hbm [thread:$0]  %s1639, 256, %s1637, %s1625, 128, 128, 8
        $region44: #{_lambda_.1} parent=39 // pred_fallthru
          _
      $region40: #{_lambda_.1} parent=5 // pred_fallthru
        _
      %p1645 = scmp.le.s32.totalorder 2, %s14
      // Predicated region
      $region45: #{_lambda_.1} parent=5 // pred_check
        %p1646 = pneg %p1645
      $region46: #{_lambda_.1} parent=5 // pred_check_branch
        %1648 = sbr.rel (%p1646) target = $region48
      $region47: #{_lambda_.1} parent=5 // pred_region
        %s1649 = ssub.s32 %s14, 2
        // Predicated region
        $region49: #{_lambda_.1} parent=47 // pred_check
          %p1650 = pneg %p153
        $region50: #{_lambda_.1} parent=47 // pred_check_branch
          %1652 = sbr.rel (%p1650) target = $region52
        $region51: #{_lambda_.1} parent=47 // pred_region
          %s1653 = sand.u32 %s138, 1
          %s1654 = scalar_lea.sflag [#allocation8], %s1653
          %s1655 = sand.u32 %s138, 1
          %s1656 = smul.addr %s1655, 16
          %s1657 = scalar_lea.vmem [#allocation7], %s1656
          %1658 = dma.done %s1654, 256
        $region52: #{_lambda_.1} parent=47 // pred_fallthru
          _
      $region48: #{_lambda_.1} parent=5 // pred_fallthru
        _
    $region6: #{_lambda_.1} parent=1 // loop_footer
      %s18 = sadd.s32 1, %s14
    $region7: #{_lambda_.1} parent=1 // loop_footer_branch
      %13 = sbr.rel target = $region3
    $region8: #{_lambda_.1} parent=1 // loop_exit
      _
    %1659 = vsyncpa [#allocation8], 1
    %s1660 = scalar_lea.sflag [#allocation8], 1
    %1661 = vsyncpa %s1660, 1

</llo_original>
